<compile_context>
chip_gen: v7x
topology: tpu7x:2x2x1
jax: 0.10.0
libtpu: 0.0.40
codegen_flags: <defaults>
</compile_context>

<pallas_src>
import numpy as np
import jax
import jax.numpy as jnp
from jax.experimental import pallas as pl
from jax.experimental.pallas import tpu as pltpu

IN_CHANNELS = 4            # `in_channels` (small synthetic value)
MID_CHANNELS = 8           # `channels` in the PyTorch module (512 there, small here)
SIZES = (1, 2, 3, 6)
NUM_STAGES = len(SIZES)
H = W = 10                 # pooling params in the module assume a 10x10 feature map
HW = H * W
HWP = 128                  # H*W padded to one full lane tile (lane-dense activations/stores)
PP = 128                   # per-stage pooled size padded to one lane tile (aligned slices)


# ----------------------------------------------------------------------------
# glue: build the (tiny) pooling / bilinear-interpolation matrices in numpy
# ----------------------------------------------------------------------------
def _avgpool_matrix(in_size, kernel, stride):
    out_size = (in_size - kernel) // stride + 1
    m = np.zeros((out_size, in_size), np.float64)
    for i in range(out_size):
        m[i, i * stride:i * stride + kernel] = 1.0 / kernel
    return m


def _bilinear_matrix(out_size, in_size):
    # matches F.interpolate(mode='bilinear', align_corners=False)
    m = np.zeros((out_size, in_size), np.float64)
    scale = in_size / out_size
    for i in range(out_size):
        src = max((i + 0.5) * scale - 0.5, 0.0)
        x0 = min(int(np.floor(src)), in_size - 1)
        x1 = min(x0 + 1, in_size - 1)
        w1 = src - x0
        m[i, x0] += 1.0 - w1
        m[i, x1] += w1
    return m


def _stage_matrices():
    """Per-stage dense (P_s, U_s): pooled = P_s @ x_hw,  upsampled = U_s @ pooled."""
    mats = []
    for size in SIZES:
        stride = int(np.floor(10 / size))
        kernel = 10 - (size - 1) * stride
        ph = _avgpool_matrix(H, kernel, stride)
        pw = _avgpool_matrix(W, kernel, stride)
        p = np.kron(ph, pw)                               # (hp*wp, H*W)
        uh = _bilinear_matrix(H, ph.shape[0])
        uw = _bilinear_matrix(W, pw.shape[0])
        u = np.kron(uh, uw)                               # (H*W, hp*wp)
        mats.append((p, u))
    return mats


def build_spatial_matrices():
    """Stacked + zero-padded, *transposed* pooling / upsampling matrices.

    p_t: (HWP, NUM_STAGES*PP)  so that  pooled = x(.., HWP) @ p_t
    u_t: (NUM_STAGES*PP, HWP)  so that  up     = z(.., S*PP) @ u_t
    Zero rows/cols make the padding inert (see invariant note at the top).
    """
    p_t = np.zeros((HWP, NUM_STAGES * PP), np.float64)
    u_t = np.zeros((NUM_STAGES * PP, HWP), np.float64)
    for s, (p, u) in enumerate(_stage_matrices()):
        ps = p.shape[0]
        assert ps <= PP
        p_t[:HW, s * PP:s * PP + ps] = p.T
        u_t[s * PP:s * PP + ps, :HW] = u.T
    return p_t, u_t


# ----------------------------------------------------------------------------
# Pallas kernel: one batch *tile* per grid step, everything fused, lane-dense
# ----------------------------------------------------------------------------
def ppm_kernel(x_ref, pt_ref, w_ref, b_ref, ut_ref, wb_ref, wbx_ref, bb_ref, o_ref):
    x = x_ref[...]                                                    # (B*Cin, HWP)
    # identity branch of the bottleneck (the `feats` chunk of the cat)
    acc = jnp.dot(wbx_ref[...], x, preferred_element_type=jnp.float32)          # (B*Cin, HWP)
    # all 4 avg-pools for all B_TILE batch elements: ONE stacked MXU call
    pooled = jnp.dot(x, pt_ref[...], preferred_element_type=jnp.float32)        # (B*Cin, S*PP)
    z_chunks = []
    for s in range(NUM_STAGES):                                       # unrolled, tiny matmuls
        ps = pooled[:, s * PP:(s + 1) * PP]                           # lane-tile-aligned slice
        # 1x1 conv + bias + relu_ (block-diagonal over the batch tile)
        y = jnp.dot(w_ref[s], ps, preferred_element_type=jnp.float32) + b_ref[s]
        y = jnp.maximum(y, 0.0)                                       # relu_(stage(feats))
        # bottleneck stage chunk applied BEFORE the upsample (y @ Wb first)
        z_chunks.append(jnp.dot(wb_ref[s], y, preferred_element_type=jnp.float32))
    z_cat = jnp.concatenate(z_chunks, axis=1)                         # (B*Cin, S*PP)
    # all 4 bilinear upsamples folded into the bottleneck: ONE stacked MXU call
    acc = acc + jnp.dot(z_cat, ut_ref[...], preferred_element_type=jnp.float32)
    o_ref[...] = jnp.maximum(acc + bb_ref[...], 0.0)                  # relu_(bottleneck(cat))


def pyramid_pooling_module(feats_nchw, params, b_tile=None):
    n = feats_nchw.shape[0]
    if b_tile is None:
        # amortize per-grid-step overhead; keep B_TILE*Cin a sublane-tile multiple of 8
        b_tile = max(1, min(8, n))
        while (b_tile * IN_CHANNELS) % 8 != 0:
            b_tile += 1
    n_pad = -(-n // b_tile) * b_tile
    bc = b_tile * IN_CHANNELS
    bm = b_tile * MID_CHANNELS

    # glue: NCHW -> (n_pad*Cin, HWP), zero-padded (no transposes needed in this layout)
    x = feats_nchw.reshape(n, IN_CHANNELS, HW)
    x = jnp.pad(x, ((0, n_pad - n), (0, 0), (0, HWP - HW)))
    x2 = x.reshape(n_pad * IN_CHANNELS, HWP)

    # glue: pack per-stage weights block-diagonally so one matmul covers the whole batch tile
    eye_b = jnp.eye(b_tile, dtype=jnp.float32)
    w_bd = jnp.stack([jnp.kron(eye_b, params["w_all"][s].T) for s in range(NUM_STAGES)])       # (S, B*Cmid, B*Cin)
    wb_bd = jnp.stack([jnp.kron(eye_b, params["wb_stages"][s].T) for s in range(NUM_STAGES)])  # (S, B*Cin, B*Cmid)
    b_bd = jnp.tile(params["b_all"], (1, b_tile))[:, :, None]                                  # (S, B*Cmid, 1)
    wbx_bd = jnp.kron(eye_b, params["wb_x"].T)                                                 # (B*Cin, B*Cin)
    bb_bd = jnp.tile(params["bb"], (b_tile,))[:, None]                                         # (B*Cin, 1)

    out2 = pl.pallas_call(
        ppm_kernel,
        out_shape=jax.ShapeDtypeStruct((n_pad * IN_CHANNELS, HWP), jnp.float32),
        grid=(n_pad // b_tile,),
        in_specs=[
            pl.BlockSpec((bc, HWP), lambda i: (i, 0)),                          # x (batch tile)
            pl.BlockSpec((HWP, NUM_STAGES * PP), lambda i: (0, 0)),             # P^T (pooling, stacked)
            pl.BlockSpec((NUM_STAGES, bm, bc), lambda i: (0, 0, 0)),            # stage conv W (block-diag)
            pl.BlockSpec((NUM_STAGES, bm, 1), lambda i: (0, 0, 0)),             # stage conv bias
            pl.BlockSpec((NUM_STAGES * PP, HWP), lambda i: (0, 0)),             # U^T (bilinear, stacked)
            pl.BlockSpec((NUM_STAGES, bc, bm), lambda i: (0, 0, 0)),            # bottleneck W (stage chunks)
            pl.BlockSpec((bc, bc), lambda i: (0, 0)),                           # bottleneck W (feats chunk)
            pl.BlockSpec((bc, 1), lambda i: (0, 0)),                            # bottleneck bias
        ],
        out_specs=pl.BlockSpec((bc, HWP), lambda i: (i, 0)),                    # lane-dense store
        compiler_params=pltpu.CompilerParams(dimension_semantics=("parallel",)),
    )(x2, params["p_t"], w_bd, b_bd, params["u_t"], wb_bd, wbx_bd, bb_bd)

    # glue: back to NCHW like the PyTorch module (just slice off the padding)
    out = out2.reshape(n_pad, IN_CHANNELS, HWP)[:n, :, :HW]
    return out.reshape(n, IN_CHANNELS, H, W)


# ----------------------------------------------------------------------------
# deterministic synthetic parameters + float64 numpy reference
# ----------------------------------------------------------------------------
def init_params(key):
    p_t, u_t = build_spatial_matrices()
    ks = jax.random.split(key, 5)
    return {
        "p_t": jnp.asarray(p_t, jnp.float32),
        "u_t": jnp.asarray(u_t, jnp.float32),
        "w_all": 0.1 * jax.random.normal(ks[0], (NUM_STAGES, IN_CHANNELS, MID_CHANNELS), jnp.float32),
        "b_all": 0.1 * jax.random.normal(ks[1], (NUM_STAGES, MID_CHANNELS), jnp.float32),
        "wb_stages": 0.1 * jax.random.normal(ks[2], (NUM_STAGES, MID_CHANNELS, IN_CHANNELS), jnp.float32),
        "wb_x": 0.1 * jax.random.normal(ks[3], (IN_CHANNELS, IN_CHANNELS), jnp.float32),
        "bb": 0.1 * jax.random.normal(ks[4], (IN_CHANNELS,), jnp.float32),
    }


def reference(feats_nchw, params):
    x = np.asarray(feats_nchw, np.float64)                           # (N, C, H, W)
    n = x.shape[0]
    xl = x.reshape(n, IN_CHANNELS, HW).transpose(0, 2, 1)            # (N, HW, Cin) channels-last
    w_all = np.asarray(params["w_all"], np.float64)
    b_all = np.asarray(params["b_all"], np.float64)
    wb_s = np.asarray(params["wb_stages"], np.float64)
    wb_x = np.asarray(params["wb_x"], np.float64)
    bb = np.asarray(params["bb"], np.float64)
    mats = _stage_matrices()
    outs = []
    for b in range(n):
        acc = xl[b] @ wb_x + bb[None, :]
        for s in range(NUM_STAGES):
            p_s, u_s = mats[s]
            pooled = p_s @ xl[b]
            y = np.maximum(pooled @ w_all[s] + b_all[s][None, :], 0.0)
            acc = acc + (u_s @ y) @ wb_s[s]
        outs.append(np.maximum(acc, 0.0))
    out = np.stack(outs)                                             # (N, HW, Cin)
    return out.transpose(0, 2, 1).reshape(n, IN_CHANNELS, H, W)


if __name__ == "__main__":
    key = jax.random.PRNGKey(0)
    pkey, xkey = jax.random.split(key)
    params = init_params(pkey)
    feats = jax.random.normal(xkey, (2, IN_CHANNELS, H, W), jnp.float32)  # NCHW like PyTorch

    out = jax.block_until_ready(pyramid_pooling_module(feats, params))
    assert out.shape == (2, IN_CHANNELS, H, W), out.shape

    ref = reference(feats, params)
    err = float(np.max(np.abs(np.asarray(out, np.float64) - ref)))
    assert np.isfinite(np.asarray(out)).all()
    assert err < 5e-3, f"max abs err {err}"

    print("KERNEL_OK")
</pallas_src>

<mosaic_0001>
module attributes {stable_mosaic.version = 11 : i64} {
  func.func @ppm_kernel(%arg0: i32, %arg1: memref<8x128xf32, #tpu.memory_space<vmem>>, %arg2: memref<128x512xf32, #tpu.memory_space<vmem>>, %arg3: memref<4x16x8xf32, #tpu.memory_space<vmem>>, %arg4: memref<4x16x1xf32, #tpu.memory_space<vmem>>, %arg5: memref<512x128xf32, #tpu.memory_space<vmem>>, %arg6: memref<4x8x16xf32, #tpu.memory_space<vmem>>, %arg7: memref<8x8xf32, #tpu.memory_space<vmem>>, %arg8: memref<8x1xf32, #tpu.memory_space<vmem>>, %arg9: memref<8x128xf32, #tpu.memory_space<vmem>>) attributes {dimension_semantics = [#tpu.dimension_semantics<parallel>], iteration_bounds = array<i64: 1>, scalar_prefetch = 0 : i64, scratch_operands = 0 : i64, tpu.core_type = #tpu.core_type<tc>, window_params = [{transform_indices = @transform_0, window_bounds = array<i64: 8, 128>}, {pipeline_mode = #tpu.pipeline_mode<synchronous>, transform_indices = @transform_1, window_bounds = array<i64: 128, 512>}, {pipeline_mode = #tpu.pipeline_mode<synchronous>, transform_indices = @transform_2, window_bounds = array<i64: 4, 16, 8>}, {pipeline_mode = #tpu.pipeline_mode<synchronous>, transform_indices = @transform_3, window_bounds = array<i64: 4, 16, 1>}, {pipeline_mode = #tpu.pipeline_mode<synchronous>, transform_indices = @transform_4, window_bounds = array<i64: 512, 128>}, {pipeline_mode = #tpu.pipeline_mode<synchronous>, transform_indices = @transform_5, window_bounds = array<i64: 4, 8, 16>}, {pipeline_mode = #tpu.pipeline_mode<synchronous>, transform_indices = @transform_6, window_bounds = array<i64: 8, 8>}, {pipeline_mode = #tpu.pipeline_mode<synchronous>, transform_indices = @transform_7, window_bounds = array<i64: 8, 1>}, {transform_indices = @transform_8, window_bounds = array<i64: 8, 128>}]} {
    %c0 = arith.constant 0 : index
    %c0_0 = arith.constant 0 : index
    %0 = vector.load %arg1[%c0, %c0_0] : memref<8x128xf32, #tpu.memory_space<vmem>>, vector<8x128xf32>
    %c0_1 = arith.constant 0 : index
    %c0_2 = arith.constant 0 : index
    %1 = vector.load %arg7[%c0_1, %c0_2] : memref<8x8xf32, #tpu.memory_space<vmem>>, vector<8x8xf32>
    %cst = arith.constant dense<0.000000e+00> : vector<8x128xf32>
    %2 = tpu.matmul %1, %0, %cst {dimension_numbers = #tpu.dot_dimension_numbers<[1], [0], [0], [1], [0, 0, 1, 1], [], []>} : vector<8x8xf32>, vector<8x128xf32>, vector<8x128xf32> -> vector<8x128xf32>
    %c0_3 = arith.constant 0 : index
    %c0_4 = arith.constant 0 : index
    %3 = vector.load %arg2[%c0_3, %c0_4] : memref<128x512xf32, #tpu.memory_space<vmem>>, vector<128x512xf32>
    %cst_5 = arith.constant dense<0.000000e+00> : vector<8x512xf32>
    %4 = tpu.matmul %0, %3, %cst_5 {dimension_numbers = #tpu.dot_dimension_numbers<[1], [0], [0], [1], [0, 0, 1, 1], [], []>} : vector<8x128xf32>, vector<128x512xf32>, vector<8x512xf32> -> vector<8x512xf32>
    %5 = vector.extract_strided_slice %4 {offsets = [0, 0], sizes = [8, 128], strides = [1, 1]} : vector<8x512xf32> to vector<8x128xf32>
    %c0_6 = arith.constant 0 : index
    %c0_7 = arith.constant 0 : index
    %c0_8 = arith.constant 0 : index
    %6 = vector.load %arg3[%c0_6, %c0_7, %c0_8] : memref<4x16x8xf32, #tpu.memory_space<vmem>>, vector<1x16x8xf32>
    %7 = vector.shape_cast %6 : vector<1x16x8xf32> to vector<16x8xf32>
    %cst_9 = arith.constant dense<0.000000e+00> : vector<16x128xf32>
    %8 = tpu.matmul %7, %5, %cst_9 {dimension_numbers = #tpu.dot_dimension_numbers<[1], [0], [0], [1], [0, 0, 1, 1], [], []>} : vector<16x8xf32>, vector<8x128xf32>, vector<16x128xf32> -> vector<16x128xf32>
    %c0_10 = arith.constant 0 : index
    %c0_11 = arith.constant 0 : index
    %c0_12 = arith.constant 0 : index
    %9 = vector.load %arg4[%c0_10, %c0_11, %c0_12] : memref<4x16x1xf32, #tpu.memory_space<vmem>>, vector<1x16x1xf32>
    %10 = vector.shape_cast %9 : vector<1x16x1xf32> to vector<16x1xf32>
    %11 = vector.broadcast %10 : vector<16x1xf32> to vector<16x128xf32>
    %12 = arith.addf %8, %11 : vector<16x128xf32>
    %cst_13 = arith.constant 0.000000e+00 : f32
    %13 = vector.broadcast %cst_13 : f32 to vector<16x128xf32>
    %14 = arith.maximumf %12, %13 : vector<16x128xf32>
    %c0_14 = arith.constant 0 : index
    %c0_15 = arith.constant 0 : index
    %c0_16 = arith.constant 0 : index
    %15 = vector.load %arg6[%c0_14, %c0_15, %c0_16] : memref<4x8x16xf32, #tpu.memory_space<vmem>>, vector<1x8x16xf32>
    %16 = vector.shape_cast %15 : vector<1x8x16xf32> to vector<8x16xf32>
    %cst_17 = arith.constant dense<0.000000e+00> : vector<8x128xf32>
    %17 = tpu.matmul %16, %14, %cst_17 {dimension_numbers = #tpu.dot_dimension_numbers<[1], [0], [0], [1], [0, 0, 1, 1], [], []>} : vector<8x16xf32>, vector<16x128xf32>, vector<8x128xf32> -> vector<8x128xf32>
    %18 = vector.extract_strided_slice %4 {offsets = [0, 128], sizes = [8, 128], strides = [1, 1]} : vector<8x512xf32> to vector<8x128xf32>
    %c1 = arith.constant 1 : index
    %c0_18 = arith.constant 0 : index
    %c0_19 = arith.constant 0 : index
    %19 = vector.load %arg3[%c1, %c0_18, %c0_19] : memref<4x16x8xf32, #tpu.memory_space<vmem>>, vector<1x16x8xf32>
    %20 = vector.shape_cast %19 : vector<1x16x8xf32> to vector<16x8xf32>
    %cst_20 = arith.constant dense<0.000000e+00> : vector<16x128xf32>
    %21 = tpu.matmul %20, %18, %cst_20 {dimension_numbers = #tpu.dot_dimension_numbers<[1], [0], [0], [1], [0, 0, 1, 1], [], []>} : vector<16x8xf32>, vector<8x128xf32>, vector<16x128xf32> -> vector<16x128xf32>
    %c1_21 = arith.constant 1 : index
    %c0_22 = arith.constant 0 : index
    %c0_23 = arith.constant 0 : index
    %22 = vector.load %arg4[%c1_21, %c0_22, %c0_23] : memref<4x16x1xf32, #tpu.memory_space<vmem>>, vector<1x16x1xf32>
    %23 = vector.shape_cast %22 : vector<1x16x1xf32> to vector<16x1xf32>
    %24 = vector.broadcast %23 : vector<16x1xf32> to vector<16x128xf32>
    %25 = arith.addf %21, %24 : vector<16x128xf32>
    %cst_24 = arith.constant 0.000000e+00 : f32
    %26 = vector.broadcast %cst_24 : f32 to vector<16x128xf32>
    %27 = arith.maximumf %25, %26 : vector<16x128xf32>
    %c1_25 = arith.constant 1 : index
    %c0_26 = arith.constant 0 : index
    %c0_27 = arith.constant 0 : index
    %28 = vector.load %arg6[%c1_25, %c0_26, %c0_27] : memref<4x8x16xf32, #tpu.memory_space<vmem>>, vector<1x8x16xf32>
    %29 = vector.shape_cast %28 : vector<1x8x16xf32> to vector<8x16xf32>
    %cst_28 = arith.constant dense<0.000000e+00> : vector<8x128xf32>
    %30 = tpu.matmul %29, %27, %cst_28 {dimension_numbers = #tpu.dot_dimension_numbers<[1], [0], [0], [1], [0, 0, 1, 1], [], []>} : vector<8x16xf32>, vector<16x128xf32>, vector<8x128xf32> -> vector<8x128xf32>
    %31 = vector.extract_strided_slice %4 {offsets = [0, 256], sizes = [8, 128], strides = [1, 1]} : vector<8x512xf32> to vector<8x128xf32>
    %c2 = arith.constant 2 : index
    %c0_29 = arith.constant 0 : index
    %c0_30 = arith.constant 0 : index
    %32 = vector.load %arg3[%c2, %c0_29, %c0_30] : memref<4x16x8xf32, #tpu.memory_space<vmem>>, vector<1x16x8xf32>
    %33 = vector.shape_cast %32 : vector<1x16x8xf32> to vector<16x8xf32>
    %cst_31 = arith.constant dense<0.000000e+00> : vector<16x128xf32>
    %34 = tpu.matmul %33, %31, %cst_31 {dimension_numbers = #tpu.dot_dimension_numbers<[1], [0], [0], [1], [0, 0, 1, 1], [], []>} : vector<16x8xf32>, vector<8x128xf32>, vector<16x128xf32> -> vector<16x128xf32>
    %c2_32 = arith.constant 2 : index
    %c0_33 = arith.constant 0 : index
    %c0_34 = arith.constant 0 : index
    %35 = vector.load %arg4[%c2_32, %c0_33, %c0_34] : memref<4x16x1xf32, #tpu.memory_space<vmem>>, vector<1x16x1xf32>
    %36 = vector.shape_cast %35 : vector<1x16x1xf32> to vector<16x1xf32>
    %37 = vector.broadcast %36 : vector<16x1xf32> to vector<16x128xf32>
    %38 = arith.addf %34, %37 : vector<16x128xf32>
    %cst_35 = arith.constant 0.000000e+00 : f32
    %39 = vector.broadcast %cst_35 : f32 to vector<16x128xf32>
    %40 = arith.maximumf %38, %39 : vector<16x128xf32>
    %c2_36 = arith.constant 2 : index
    %c0_37 = arith.constant 0 : index
    %c0_38 = arith.constant 0 : index
    %41 = vector.load %arg6[%c2_36, %c0_37, %c0_38] : memref<4x8x16xf32, #tpu.memory_space<vmem>>, vector<1x8x16xf32>
    %42 = vector.shape_cast %41 : vector<1x8x16xf32> to vector<8x16xf32>
    %cst_39 = arith.constant dense<0.000000e+00> : vector<8x128xf32>
    %43 = tpu.matmul %42, %40, %cst_39 {dimension_numbers = #tpu.dot_dimension_numbers<[1], [0], [0], [1], [0, 0, 1, 1], [], []>} : vector<8x16xf32>, vector<16x128xf32>, vector<8x128xf32> -> vector<8x128xf32>
    %44 = vector.extract_strided_slice %4 {offsets = [0, 384], sizes = [8, 128], strides = [1, 1]} : vector<8x512xf32> to vector<8x128xf32>
    %c3 = arith.constant 3 : index
    %c0_40 = arith.constant 0 : index
    %c0_41 = arith.constant 0 : index
    %45 = vector.load %arg3[%c3, %c0_40, %c0_41] : memref<4x16x8xf32, #tpu.memory_space<vmem>>, vector<1x16x8xf32>
    %46 = vector.shape_cast %45 : vector<1x16x8xf32> to vector<16x8xf32>
    %cst_42 = arith.constant dense<0.000000e+00> : vector<16x128xf32>
    %47 = tpu.matmul %46, %44, %cst_42 {dimension_numbers = #tpu.dot_dimension_numbers<[1], [0], [0], [1], [0, 0, 1, 1], [], []>} : vector<16x8xf32>, vector<8x128xf32>, vector<16x128xf32> -> vector<16x128xf32>
    %c3_43 = arith.constant 3 : index
    %c0_44 = arith.constant 0 : index
    %c0_45 = arith.constant 0 : index
    %48 = vector.load %arg4[%c3_43, %c0_44, %c0_45] : memref<4x16x1xf32, #tpu.memory_space<vmem>>, vector<1x16x1xf32>
    %49 = vector.shape_cast %48 : vector<1x16x1xf32> to vector<16x1xf32>
    %50 = vector.broadcast %49 : vector<16x1xf32> to vector<16x128xf32>
    %51 = arith.addf %47, %50 : vector<16x128xf32>
    %cst_46 = arith.constant 0.000000e+00 : f32
    %52 = vector.broadcast %cst_46 : f32 to vector<16x128xf32>
    %53 = arith.maximumf %51, %52 : vector<16x128xf32>
    %c3_47 = arith.constant 3 : index
    %c0_48 = arith.constant 0 : index
    %c0_49 = arith.constant 0 : index
    %54 = vector.load %arg6[%c3_47, %c0_48, %c0_49] : memref<4x8x16xf32, #tpu.memory_space<vmem>>, vector<1x8x16xf32>
    %55 = vector.shape_cast %54 : vector<1x8x16xf32> to vector<8x16xf32>
    %cst_50 = arith.constant dense<0.000000e+00> : vector<8x128xf32>
    %56 = tpu.matmul %55, %53, %cst_50 {dimension_numbers = #tpu.dot_dimension_numbers<[1], [0], [0], [1], [0, 0, 1, 1], [], []>} : vector<8x16xf32>, vector<16x128xf32>, vector<8x128xf32> -> vector<8x128xf32>
    %57 = tpu.concatenate %17, %30, %43, %56 in 1 : vector<8x128xf32>, vector<8x128xf32>, vector<8x128xf32>, vector<8x128xf32> -> vector<8x512xf32>
    %c0_51 = arith.constant 0 : index
    %c0_52 = arith.constant 0 : index
    %58 = vector.load %arg5[%c0_51, %c0_52] : memref<512x128xf32, #tpu.memory_space<vmem>>, vector<512x128xf32>
    %cst_53 = arith.constant dense<0.000000e+00> : vector<8x128xf32>
    %59 = tpu.matmul %57, %58, %cst_53 {dimension_numbers = #tpu.dot_dimension_numbers<[1], [0], [0], [1], [0, 0, 1, 1], [], []>} : vector<8x512xf32>, vector<512x128xf32>, vector<8x128xf32> -> vector<8x128xf32>
    %60 = arith.addf %2, %59 : vector<8x128xf32>
    %c0_54 = arith.constant 0 : index
    %c0_55 = arith.constant 0 : index
    %61 = vector.load %arg8[%c0_54, %c0_55] : memref<8x1xf32, #tpu.memory_space<vmem>>, vector<8x1xf32>
    %62 = vector.broadcast %61 : vector<8x1xf32> to vector<8x128xf32>
    %63 = arith.addf %60, %62 : vector<8x128xf32>
    %cst_56 = arith.constant 0.000000e+00 : f32
    %64 = vector.broadcast %cst_56 : f32 to vector<8x128xf32>
    %65 = arith.maximumf %63, %64 : vector<8x128xf32>
    %c0_57 = arith.constant 0 : index
    %c0_58 = arith.constant 0 : index
    %66 = vector.load %arg9[%c0_57, %c0_58] : memref<8x128xf32, #tpu.memory_space<vmem>>, vector<8x128xf32>
    tpu.vector_store %arg9[%c0_57, %c0_58], %65 {strides = array<i32>} : memref<8x128xf32, #tpu.memory_space<vmem>>, vector<8x128xf32>,
    return
  }
  func.func @transform_0(%arg0: i32) -> (i32, i32) {
    %c0_i32 = arith.constant 0 : i32
    %c0_i32_0 = arith.constant 0 : i32
    return %arg0, %c0_i32 : i32, i32
  }
  func.func @transform_1(%arg0: i32) -> (i32, i32) {
    %c0_i32 = arith.constant 0 : i32
    %c0_i32_0 = arith.constant 0 : i32
    %c0_i32_1 = arith.constant 0 : i32
    return %c0_i32, %c0_i32_0 : i32, i32
  }
  func.func @transform_2(%arg0: i32) -> (i32, i32, i32) {
    %c0_i32 = arith.constant 0 : i32
    %c0_i32_0 = arith.constant 0 : i32
    %c0_i32_1 = arith.constant 0 : i32
    %c0_i32_2 = arith.constant 0 : i32
    return %c0_i32, %c0_i32_0, %c0_i32_1 : i32, i32, i32
  }
  func.func @transform_3(%arg0: i32) -> (i32, i32, i32) {
    %c0_i32 = arith.constant 0 : i32
    %c0_i32_0 = arith.constant 0 : i32
    %c0_i32_1 = arith.constant 0 : i32
    %c0_i32_2 = arith.constant 0 : i32
    return %c0_i32, %c0_i32_0, %c0_i32_1 : i32, i32, i32
  }
  func.func @transform_4(%arg0: i32) -> (i32, i32) {
    %c0_i32 = arith.constant 0 : i32
    %c0_i32_0 = arith.constant 0 : i32
    %c0_i32_1 = arith.constant 0 : i32
    return %c0_i32, %c0_i32_0 : i32, i32
  }
  func.func @transform_5(%arg0: i32) -> (i32, i32, i32) {
    %c0_i32 = arith.constant 0 : i32
    %c0_i32_0 = arith.constant 0 : i32
    %c0_i32_1 = arith.constant 0 : i32
    %c0_i32_2 = arith.constant 0 : i32
    return %c0_i32, %c0_i32_0, %c0_i32_1 : i32, i32, i32
  }
  func.func @transform_6(%arg0: i32) -> (i32, i32) {
    %c0_i32 = arith.constant 0 : i32
    %c0_i32_0 = arith.constant 0 : i32
    %c0_i32_1 = arith.constant 0 : i32
    return %c0_i32, %c0_i32_0 : i32, i32
  }
  func.func @transform_7(%arg0: i32) -> (i32, i32) {
    %c0_i32 = arith.constant 0 : i32
    %c0_i32_0 = arith.constant 0 : i32
    %c0_i32_1 = arith.constant 0 : i32
    return %c0_i32, %c0_i32_0 : i32, i32
  }
  func.func @transform_8(%arg0: i32) -> (i32, i32) {
    %c0_i32 = arith.constant 0 : i32
    %c0_i32_0 = arith.constant 0 : i32
    return %arg0, %c0_i32 : i32, i32
  }
}

</mosaic_0001>

<llo_original>
// kernel: tpu_custom_call.1
$region0: #{tpu_custom_call.1}
  #allocation0 [shape = 'u32[]', space=smem, size = 0x4, offset = 0x4, fixed_abs, tag = 'smem constant byte address 0x4 - core index']
  #allocation1 [shape = 'u32[144,128]{1,0:T(1,128)}', space=vmem, size = 0x12000, scoped, tag = 'internal scratch']
  %s0 = inlined_call_operand.vmem [shape: f32[8,128], index: 0, kind: input, shape index: {}]
  %s1 = inlined_call_operand.hbm [shape: f32[128,512], index: 1, kind: input, shape index: {}]
  %s2 = inlined_call_operand.vmem [shape: f32[4,16,8], index: 2, kind: input, shape index: {}]
  %s3 = inlined_call_operand.vmem [shape: f32[4,16,1], index: 3, kind: input, shape index: {}]
  %s4 = inlined_call_operand.hbm [shape: f32[512,128], index: 4, kind: input, shape index: {}]
  %s5 = inlined_call_operand.vmem [shape: f32[4,8,16], index: 5, kind: input, shape index: {}]
  %s6 = inlined_call_operand.vmem [shape: f32[8,8], index: 6, kind: input, shape index: {}]
  %s7 = inlined_call_operand.vmem [shape: f32[8,1], index: 7, kind: input, shape index: {}]
  %s8 = inlined_call_operand.hbm [shape: f32[8,128], index: 8, kind: output, shape index: {}]
  %s9 = sld [smem:[#allocation0]]
  $region50: #{tpu_custom_call.1} parent=0
    _
  %s11 = ssub.s32 1, %s9
  %s12 = scalar_select 0, %s11, %s9
  $region1: #{tpu_custom_call.1} parent=0
    #allocation2 [shape = 'u8[262144]{0}', space=vmem, size = 0x40000, scoped, tag = 'input window, operand 1, single buffered']
    #allocation3 [shape = 's32[1]{0}', space=sflag, size = 0x4, scoped, tag = 'scoped memory for tpu_custom_call.1']
    #allocation4 [shape = 's32[1]{0}', space=sflag, size = 0x4, scoped, tag = 'scoped memory for tpu_custom_call.1']
    #allocation5 [shape = 'u8[262144]{0}', space=vmem, size = 0x40000, scoped, tag = 'input window, operand 4, single buffered']
    #allocation6 [shape = 's32[1]{0}', space=sflag, size = 0x4, scoped, tag = 'scoped memory for tpu_custom_call.1']
    #allocation7 [shape = 'u8[4096]{0}', space=vmem, size = 0x1000, scoped, tag = 'output window, operand 0, single buffered']
    %13 = vsyncpa [#allocation3], 0
    %14 = vsyncpa [#allocation6], 0
    %15 = vsyncpa [#allocation4], 0
    // Predicated region
    $region2: #{tpu_custom_call.1} parent=1 // pred_check
      _
    $region3: #{tpu_custom_call.1} parent=1 // pred_check_branch
      %17 = sbr.rel (0) target = $region5
    $region4: #{tpu_custom_call.1} parent=1 // pred_region
      _
    $region5: #{tpu_custom_call.1} parent=1 // pred_fallthru
      _
    // Predicated region
    $region6: #{tpu_custom_call.1} parent=1 // pred_check
      _
    $region7: #{tpu_custom_call.1} parent=1 // pred_check_branch
      %19 = sbr.rel (0) target = $region9
    $region8: #{tpu_custom_call.1} parent=1 // pred_region
      %s21 = ssub.s32 8192, 8192
      %22 = vsyncadd [#allocation3], %s21
      %s23 = sshll.u32 [#allocation2], 4
      %s24 = int_to_ptr.vmem [resolvable:$true] %s23
      %29 = dma.hbm_to_vmem [thread:$0]  %s1, 8192, %s24, [#allocation3], 512, 512, 32
    $region9: #{tpu_custom_call.1} parent=1 // pred_fallthru
      _
    // Predicated region
    $region10: #{tpu_custom_call.1} parent=1 // pred_check
      _
    $region11: #{tpu_custom_call.1} parent=1 // pred_check_branch
      %31 = sbr.rel (0) target = $region13
    $region12: #{tpu_custom_call.1} parent=1 // pred_region
      _
    $region13: #{tpu_custom_call.1} parent=1 // pred_fallthru
      _
    // Predicated region
    $region14: #{tpu_custom_call.1} parent=1 // pred_check
      _
    $region15: #{tpu_custom_call.1} parent=1 // pred_check_branch
      %33 = sbr.rel (0) target = $region17
    $region16: #{tpu_custom_call.1} parent=1 // pred_region
      _
    $region17: #{tpu_custom_call.1} parent=1 // pred_fallthru
      _
    // Predicated region
    $region18: #{tpu_custom_call.1} parent=1 // pred_check
      _
    $region19: #{tpu_custom_call.1} parent=1 // pred_check_branch
      %35 = sbr.rel (0) target = $region21
    $region20: #{tpu_custom_call.1} parent=1 // pred_region
      %s37 = ssub.s32 8192, 8192
      %38 = vsyncadd [#allocation6], %s37
      %s39 = sshll.u32 [#allocation5], 4
      %s40 = int_to_ptr.vmem [resolvable:$true] %s39
      %45 = dma.hbm_to_vmem [thread:$0]  %s4, 8192, %s40, [#allocation6], 128, 128, 8
    $region21: #{tpu_custom_call.1} parent=1 // pred_fallthru
      _
    // Predicated region
    $region22: #{tpu_custom_call.1} parent=1 // pred_check
      _
    $region23: #{tpu_custom_call.1} parent=1 // pred_check_branch
      %47 = sbr.rel (0) target = $region25
    $region24: #{tpu_custom_call.1} parent=1 // pred_region
      _
    $region25: #{tpu_custom_call.1} parent=1 // pred_fallthru
      _
    // Predicated region
    $region26: #{tpu_custom_call.1} parent=1 // pred_check
      _
    $region27: #{tpu_custom_call.1} parent=1 // pred_check_branch
      %49 = sbr.rel (0) target = $region29
    $region28: #{tpu_custom_call.1} parent=1 // pred_region
      _
    $region29: #{tpu_custom_call.1} parent=1 // pred_fallthru
      _
    // Predicated region
    $region30: #{tpu_custom_call.1} parent=1 // pred_check
      _
    $region31: #{tpu_custom_call.1} parent=1 // pred_check_branch
      %51 = sbr.rel (0) target = $region33
    $region32: #{tpu_custom_call.1} parent=1 // pred_region
      _
    $region33: #{tpu_custom_call.1} parent=1 // pred_fallthru
      _
    // Predicated region
    $region34: #{tpu_custom_call.1} parent=1 // pred_check
      _
    $region35: #{tpu_custom_call.1} parent=1 // pred_check_branch
      %53 = sbr.rel (0) target = $region37
    $region36: #{tpu_custom_call.1} parent=1 // pred_region
      %54 = dma.done [#allocation3], 8192
    $region37: #{tpu_custom_call.1} parent=1 // pred_fallthru
      _
    // Predicated region
    $region38: #{tpu_custom_call.1} parent=1 // pred_check
      _
    $region39: #{tpu_custom_call.1} parent=1 // pred_check_branch
      %56 = sbr.rel (0) target = $region41
    $region40: #{tpu_custom_call.1} parent=1 // pred_region
      %57 = dma.done [#allocation6], 8192
    $region41: #{tpu_custom_call.1} parent=1 // pred_fallthru
      _
    %v58 = vld [vmem:[%s0] sm:$0xff]
    %v59 = vld [vmem:[%s6] sm:$0xff]
    %v60 = vld [vmem:[#allocation2] sm:$0xff]
    %v61 = vld [vmem:[#allocation2 + $0x8] sm:$0xff]
    %v62 = vld [vmem:[#allocation2 + $0x10] sm:$0xff]
    %v63 = vld [vmem:[#allocation2 + $0x18] sm:$0xff]
    %v64 = vld [vmem:[#allocation2 + $0x20] sm:$0xff]
    %v65 = vld [vmem:[#allocation2 + $0x28] sm:$0xff]
    %v66 = vld [vmem:[#allocation2 + $0x30] sm:$0xff]
    %v67 = vld [vmem:[#allocation2 + $0x38] sm:$0xff]
    %v68 = vld [vmem:[#allocation2 + $0x40] sm:$0xff]
    %v69 = vld [vmem:[#allocation2 + $0x48] sm:$0xff]
    %v70 = vld [vmem:[#allocation2 + $0x50] sm:$0xff]
    %v71 = vld [vmem:[#allocation2 + $0x58] sm:$0xff]
    %v72 = vld [vmem:[#allocation2 + $0x60] sm:$0xff]
    %v73 = vld [vmem:[#allocation2 + $0x68] sm:$0xff]
    %v74 = vld [vmem:[#allocation2 + $0x70] sm:$0xff]
    %v75 = vld [vmem:[#allocation2 + $0x78] sm:$0xff]
    %v76 = vld [vmem:[#allocation2 + $0x80] sm:$0xff]
    %v77 = vld [vmem:[#allocation2 + $0x88] sm:$0xff]
    %v78 = vld [vmem:[#allocation2 + $0x90] sm:$0xff]
    %v79 = vld [vmem:[#allocation2 + $0x98] sm:$0xff]
    %v80 = vld [vmem:[#allocation2 + $0xa0] sm:$0xff]
    %v81 = vld [vmem:[#allocation2 + $0xa8] sm:$0xff]
    %v82 = vld [vmem:[#allocation2 + $0xb0] sm:$0xff]
    %v83 = vld [vmem:[#allocation2 + $0xb8] sm:$0xff]
    %v84 = vld [vmem:[#allocation2 + $0xc0] sm:$0xff]
    %v85 = vld [vmem:[#allocation2 + $0xc8] sm:$0xff]
    %v86 = vld [vmem:[#allocation2 + $0xd0] sm:$0xff]
    %v87 = vld [vmem:[#allocation2 + $0xd8] sm:$0xff]
    %v88 = vld [vmem:[#allocation2 + $0xe0] sm:$0xff]
    %v89 = vld [vmem:[#allocation2 + $0xe8] sm:$0xff]
    %v90 = vld [vmem:[#allocation2 + $0xf0] sm:$0xff]
    %v91 = vld [vmem:[#allocation2 + $0xf8] sm:$0xff]
    %v92 = vld [vmem:[#allocation2 + $0x100] sm:$0xff]
    %v93 = vld [vmem:[#allocation2 + $0x108] sm:$0xff]
    %v94 = vld [vmem:[#allocation2 + $0x110] sm:$0xff]
    %v95 = vld [vmem:[#allocation2 + $0x118] sm:$0xff]
    %v96 = vld [vmem:[#allocation2 + $0x120] sm:$0xff]
    %v97 = vld [vmem:[#allocation2 + $0x128] sm:$0xff]
    %v98 = vld [vmem:[#allocation2 + $0x130] sm:$0xff]
    %v99 = vld [vmem:[#allocation2 + $0x138] sm:$0xff]
    %v100 = vld [vmem:[#allocation2 + $0x140] sm:$0xff]
    %v101 = vld [vmem:[#allocation2 + $0x148] sm:$0xff]
    %v102 = vld [vmem:[#allocation2 + $0x150] sm:$0xff]
    %v103 = vld [vmem:[#allocation2 + $0x158] sm:$0xff]
    %v104 = vld [vmem:[#allocation2 + $0x160] sm:$0xff]
    %v105 = vld [vmem:[#allocation2 + $0x168] sm:$0xff]
    %v106 = vld [vmem:[#allocation2 + $0x170] sm:$0xff]
    %v107 = vld [vmem:[#allocation2 + $0x178] sm:$0xff]
    %v108 = vld [vmem:[#allocation2 + $0x180] sm:$0xff]
    %v109 = vld [vmem:[#allocation2 + $0x188] sm:$0xff]
    %v110 = vld [vmem:[#allocation2 + $0x190] sm:$0xff]
    %v111 = vld [vmem:[#allocation2 + $0x198] sm:$0xff]
    %v112 = vld [vmem:[#allocation2 + $0x1a0] sm:$0xff]
    %v113 = vld [vmem:[#allocation2 + $0x1a8] sm:$0xff]
    %v114 = vld [vmem:[#allocation2 + $0x1b0] sm:$0xff]
    %v115 = vld [vmem:[#allocation2 + $0x1b8] sm:$0xff]
    %v116 = vld [vmem:[#allocation2 + $0x1c0] sm:$0xff]
    %v117 = vld [vmem:[#allocation2 + $0x1c8] sm:$0xff]
    %v118 = vld [vmem:[#allocation2 + $0x1d0] sm:$0xff]
    %v119 = vld [vmem:[#allocation2 + $0x1d8] sm:$0xff]
    %v120 = vld [vmem:[#allocation2 + $0x1e0] sm:$0xff]
    %v121 = vld [vmem:[#allocation2 + $0x1e8] sm:$0xff]
    %v122 = vld [vmem:[#allocation2 + $0x1f0] sm:$0xff]
    %v123 = vld [vmem:[#allocation2 + $0x1f8] sm:$0xff]
    %124 = vmatprep.subr.mxu0 %v61
    %125 = vmatpush1.msra.mxu0 %v60
    %126 = vmatprep.subr.mxu0 %v65
    %127 = vmatpush1.msra.mxu0 %v64
    %128 = vmatprep.subr.mxu0 %v69
    %129 = vmatpush1.msra.mxu0 %v68
    %130 = vmatprep.subr.mxu0 %v73
    %131 = vmatpush1.msra.mxu0 %v72
    %132 = vmatprep.subr.mxu0 %v77
    %133 = vmatpush1.msra.mxu0 %v76
    %134 = vmatprep.subr.mxu0 %v81
    %135 = vmatpush1.msra.mxu0 %v80
    %136 = vmatprep.subr.mxu0 %v85
    %137 = vmatpush1.msra.mxu0 %v84
    %138 = vmatprep.subr.mxu0 %v89
    %139 = vmatpush1.msra.mxu0 %v88
    %140 = vmatprep.subr.mxu0 %v93
    %141 = vmatpush1.msra.mxu0 %v92
    %142 = vmatprep.subr.mxu0 %v97
    %143 = vmatpush1.msra.mxu0 %v96
    %144 = vmatprep.subr.mxu0 %v101
    %145 = vmatpush1.msra.mxu0 %v100
    %146 = vmatprep.subr.mxu0 %v105
    %147 = vmatpush1.msra.mxu0 %v104
    %148 = vmatprep.subr.mxu0 %v109
    %149 = vmatpush1.msra.mxu0 %v108
    %150 = vmatprep.subr.mxu0 %v113
    %151 = vmatpush1.msra.mxu0 %v112
    %152 = vmatprep.subr.mxu0 %v117
    %153 = vmatpush1.msra.mxu0 %v116
    %154 = vmatprep.subr.mxu0 %v121
    %155 = vmatpush1.msra.mxu0 %v120
    %156 = vmatprep.subr.mxu0 0.0
    %157 = vmatpush1.msra.mxu0 0.0
    %158 = vmatprep.subr.mxu0 0.0
    %159 = vmatpush1.msra.mxu0 0.0
    %160 = vmatprep.subr.mxu0 0.0
    %161 = vmatpush1.msra.mxu0 0.0
    %162 = vmatprep.subr.mxu0 0.0
    %163 = vmatpush1.msra.mxu0 0.0
    %164 = vmatprep.subr.mxu0 0.0
    %165 = vmatpush1.msra.mxu0 0.0
    %166 = vmatprep.subr.mxu0 0.0
    %167 = vmatpush1.msra.mxu0 0.0
    %168 = vmatprep.subr.mxu0 0.0
    %169 = vmatpush1.msra.mxu0 0.0
    %170 = vmatprep.subr.mxu0 0.0
    %171 = vmatpush1.msra.mxu0 0.0
    %172 = vmatprep.subr.mxu0 0.0
    %173 = vmatpush1.msra.mxu0 0.0
    %174 = vmatprep.subr.mxu0 0.0
    %175 = vmatpush1.msra.mxu0 0.0
    %176 = vmatprep.subr.mxu0 0.0
    %177 = vmatpush1.msra.mxu0 0.0
    %178 = vmatprep.subr.mxu0 0.0
    %179 = vmatpush1.msra.mxu0 0.0
    %180 = vmatprep.subr.mxu0 0.0
    %181 = vmatpush1.msra.mxu0 0.0
    %182 = vmatprep.subr.mxu0 0.0
    %183 = vmatpush1.msra.mxu0 0.0
    %184 = vmatprep.subr.mxu0 0.0
    %185 = vmatpush1.msra.mxu0 0.0
    %186 = vmatprep.subr.mxu0 0.0
    %187 = vmatpush1.msra.mxu0 0.0
    %188 = vmatprep.mubr.f32.mxu0 0.0
    %189 = vmatmul.mubr.f32.gmra.mrb[0].mxu0 %v58
    %v190 = vpop.f32.mrb[0].mxu0
    %v191 = vadd.f32 0.0, %v190
    %v192 = vpop.f32.mrb[0].mxu0
    %v193 = vadd.f32 0.0, %v192
    %194 = vdwg.mxu0
    %195 = vmatprep.subr.mxu0 %v63
    %196 = vmatpush1.msra.mxu0 %v62
    %197 = vmatprep.subr.mxu0 %v67
    %198 = vmatpush1.msra.mxu0 %v66
    %199 = vmatprep.subr.mxu0 %v71
    %200 = vmatpush1.msra.mxu0 %v70
    %201 = vmatprep.subr.mxu0 %v75
    %202 = vmatpush1.msra.mxu0 %v74
    %203 = vmatprep.subr.mxu0 %v79
    %204 = vmatpush1.msra.mxu0 %v78
    %205 = vmatprep.subr.mxu0 %v83
    %206 = vmatpush1.msra.mxu0 %v82
    %207 = vmatprep.subr.mxu0 %v87
    %208 = vmatpush1.msra.mxu0 %v86
    %209 = vmatprep.subr.mxu0 %v91
    %210 = vmatpush1.msra.mxu0 %v90
    %211 = vmatprep.subr.mxu0 %v95
    %212 = vmatpush1.msra.mxu0 %v94
    %213 = vmatprep.subr.mxu0 %v99
    %214 = vmatpush1.msra.mxu0 %v98
    %215 = vmatprep.subr.mxu0 %v103
    %216 = vmatpush1.msra.mxu0 %v102
    %217 = vmatprep.subr.mxu0 %v107
    %218 = vmatpush1.msra.mxu0 %v106
    %219 = vmatprep.subr.mxu0 %v111
    %220 = vmatpush1.msra.mxu0 %v110
    %221 = vmatprep.subr.mxu0 %v115
    %222 = vmatpush1.msra.mxu0 %v114
    %223 = vmatprep.subr.mxu0 %v119
    %224 = vmatpush1.msra.mxu0 %v118
    %225 = vmatprep.subr.mxu0 %v123
    %226 = vmatpush1.msra.mxu0 %v122
    %227 = vmatprep.subr.mxu0 0.0
    %228 = vmatpush1.msra.mxu0 0.0
    %229 = vmatprep.subr.mxu0 0.0
    %230 = vmatpush1.msra.mxu0 0.0
    %231 = vmatprep.subr.mxu0 0.0
    %232 = vmatpush1.msra.mxu0 0.0
    %233 = vmatprep.subr.mxu0 0.0
    %234 = vmatpush1.msra.mxu0 0.0
    %235 = vmatprep.subr.mxu0 0.0
    %236 = vmatpush1.msra.mxu0 0.0
    %237 = vmatprep.subr.mxu0 0.0
    %238 = vmatpush1.msra.mxu0 0.0
    %239 = vmatprep.subr.mxu0 0.0
    %240 = vmatpush1.msra.mxu0 0.0
    %241 = vmatprep.subr.mxu0 0.0
    %242 = vmatpush1.msra.mxu0 0.0
    %243 = vmatprep.subr.mxu0 0.0
    %244 = vmatpush1.msra.mxu0 0.0
    %245 = vmatprep.subr.mxu0 0.0
    %246 = vmatpush1.msra.mxu0 0.0
    %247 = vmatprep.subr.mxu0 0.0
    %248 = vmatpush1.msra.mxu0 0.0
    %249 = vmatprep.subr.mxu0 0.0
    %250 = vmatpush1.msra.mxu0 0.0
    %251 = vmatprep.subr.mxu0 0.0
    %252 = vmatpush1.msra.mxu0 0.0
    %253 = vmatprep.subr.mxu0 0.0
    %254 = vmatpush1.msra.mxu0 0.0
    %255 = vmatprep.subr.mxu0 0.0
    %256 = vmatpush1.msra.mxu0 0.0
    %257 = vmatprep.subr.mxu0 0.0
    %258 = vmatpush1.msra.mxu0 0.0
    %259 = vmatprep.mubr.f32.mxu0 0.0
    %260 = vmatmul.mubr.f32.gmra.mrb[0].mxu0 %v58
    %v261 = vpop.f32.mrb[0].mxu0
    %v262 = vadd.f32 0.0, %v261
    %v263 = vpop.f32.mrb[0].mxu0
    %v264 = vadd.f32 0.0, %v263
    %265 = vdwg.mxu0
    %v266 = vld [vmem:[%s2] sm:$0xff]
    %v267 = vld [vmem:[%s2 + $0x8] sm:$0xff]
    %v268 = vld [vmem:[%s3] sm:$0xff]
    %v269 = vld [vmem:[%s3 + $0x8] sm:$0xff]
    %271 = vset.pattern.permute.xlu0 0
    %272 = vperm.xlu0 %271, %v268
    %v273 = vpop.permute.xlu0 %272
    %276 = vset.pattern.permute.xlu0 0
    %277 = vperm.xlu0 %276, %v269
    %v278 = vpop.permute.xlu0 %277
    %vm280 = vcmask 64512
    %v282 = vsel %vm280, %v266, 0
    %v285 = vsel %vm280, %v267, 0
    %287 = vmatprep.subr.mxu0 0.0
    %288 = vmatpush1.msra.mxu0 %v191
    %289 = vmatprep.subr.mxu0 0.0
    %290 = vmatpush1.msra.mxu0 0.0
    %291 = vmatprep.subr.mxu0 0.0
    %292 = vmatpush1.msra.mxu0 0.0
    %293 = vmatprep.subr.mxu0 0.0
    %294 = vmatpush1.msra.mxu0 0.0
    %295 = vmatprep.subr.mxu0 0.0
    %296 = vmatpush1.msra.mxu0 0.0
    %297 = vmatprep.subr.mxu0 0.0
    %298 = vmatpush1.msra.mxu0 0.0
    %299 = vmatprep.subr.mxu0 0.0
    %300 = vmatpush1.msra.mxu0 0.0
    %301 = vmatprep.subr.mxu0 0.0
    %302 = vmatpush1.msra.mxu0 0.0
    %303 = vmatprep.subr.mxu0 0.0
    %304 = vmatpush1.msra.mxu0 0.0
    %305 = vmatprep.subr.mxu0 0.0
    %306 = vmatpush1.msra.mxu0 0.0
    %307 = vmatprep.subr.mxu0 0.0
    %308 = vmatpush1.msra.mxu0 0.0
    %309 = vmatprep.subr.mxu0 0.0
    %310 = vmatpush1.msra.mxu0 0.0
    %311 = vmatprep.subr.mxu0 0.0
    %312 = vmatpush1.msra.mxu0 0.0
    %313 = vmatprep.subr.mxu0 0.0
    %314 = vmatpush1.msra.mxu0 0.0
    %315 = vmatprep.subr.mxu0 0.0
    %316 = vmatpush1.msra.mxu0 0.0
    %317 = vmatprep.subr.mxu0 0.0
    %318 = vmatpush1.msra.mxu0 0.0
    %319 = vmatprep.subr.mxu0 0.0
    %320 = vmatpush1.msra.mxu0 0.0
    %321 = vmatprep.subr.mxu0 0.0
    %322 = vmatpush1.msra.mxu0 0.0
    %323 = vmatprep.subr.mxu0 0.0
    %324 = vmatpush1.msra.mxu0 0.0
    %325 = vmatprep.subr.mxu0 0.0
    %326 = vmatpush1.msra.mxu0 0.0
    %327 = vmatprep.subr.mxu0 0.0
    %328 = vmatpush1.msra.mxu0 0.0
    %329 = vmatprep.subr.mxu0 0.0
    %330 = vmatpush1.msra.mxu0 0.0
    %331 = vmatprep.subr.mxu0 0.0
    %332 = vmatpush1.msra.mxu0 0.0
    %333 = vmatprep.subr.mxu0 0.0
    %334 = vmatpush1.msra.mxu0 0.0
    %335 = vmatprep.subr.mxu0 0.0
    %336 = vmatpush1.msra.mxu0 0.0
    %337 = vmatprep.subr.mxu0 0.0
    %338 = vmatpush1.msra.mxu0 0.0
    %339 = vmatprep.subr.mxu0 0.0
    %340 = vmatpush1.msra.mxu0 0.0
    %341 = vmatprep.subr.mxu0 0.0
    %342 = vmatpush1.msra.mxu0 0.0
    %343 = vmatprep.subr.mxu0 0.0
    %344 = vmatpush1.msra.mxu0 0.0
    %345 = vmatprep.subr.mxu0 0.0
    %346 = vmatpush1.msra.mxu0 0.0
    %347 = vmatprep.subr.mxu0 0.0
    %348 = vmatpush1.msra.mxu0 0.0
    %349 = vmatprep.subr.mxu0 0.0
    %350 = vmatpush1.msra.mxu0 0.0
    %351 = vmatprep.mubr.f32.mxu0 0.0
    %352 = vmatmul.mubr.f32.gmra.mrb[0].mxu0 %v282
    %v353 = vpop.f32.mrb[0].mxu0
    %v354 = vadd.f32 %v273, %v353
    %v355 = vpop.f32.mrb[0].mxu0
    %356 = vmatprep.mubr.f32.mxu0 0.0
    %357 = vmatmul.mubr.f32.gmra.mrb[0].mxu0 %v285
    %v358 = vpop.f32.mrb[0].mxu0
    %v359 = vadd.f32 %v278, %v358
    %v360 = vpop.f32.mrb[0].mxu0
    %361 = vdwg.mxu0
    %v362 = vmax.f32 %v354, 0.0
    %v363 = vmax.f32 %v359, 0.0
    %v364 = vld [vmem:[%s5] sm:$0xff]
    %vm365 = vcmask 130048
    %v367 = vsel %vm365, %v364, 0
    %369 = vmatprep.subr.mxu0 0.0
    %370 = vmatpush1.msra.mxu0 %v362
    %371 = vmatprep.subr.mxu0 0.0
    %372 = vmatpush1.msra.mxu0 %v363
    %373 = vmatprep.subr.mxu0 0.0
    %374 = vmatpush1.msra.mxu0 0.0
    %375 = vmatprep.subr.mxu0 0.0
    %376 = vmatpush1.msra.mxu0 0.0
    %377 = vmatprep.subr.mxu0 0.0
    %378 = vmatpush1.msra.mxu0 0.0
    %379 = vmatprep.subr.mxu0 0.0
    %380 = vmatpush1.msra.mxu0 0.0
    %381 = vmatprep.subr.mxu0 0.0
    %382 = vmatpush1.msra.mxu0 0.0
    %383 = vmatprep.subr.mxu0 0.0
    %384 = vmatpush1.msra.mxu0 0.0
    %385 = vmatprep.subr.mxu0 0.0
    %386 = vmatpush1.msra.mxu0 0.0
    %387 = vmatprep.subr.mxu0 0.0
    %388 = vmatpush1.msra.mxu0 0.0
    %389 = vmatprep.subr.mxu0 0.0
    %390 = vmatpush1.msra.mxu0 0.0
    %391 = vmatprep.subr.mxu0 0.0
    %392 = vmatpush1.msra.mxu0 0.0
    %393 = vmatprep.subr.mxu0 0.0
    %394 = vmatpush1.msra.mxu0 0.0
    %395 = vmatprep.subr.mxu0 0.0
    %396 = vmatpush1.msra.mxu0 0.0
    %397 = vmatprep.subr.mxu0 0.0
    %398 = vmatpush1.msra.mxu0 0.0
    %399 = vmatprep.subr.mxu0 0.0
    %400 = vmatpush1.msra.mxu0 0.0
    %401 = vmatprep.subr.mxu0 0.0
    %402 = vmatpush1.msra.mxu0 0.0
    %403 = vmatprep.subr.mxu0 0.0
    %404 = vmatpush1.msra.mxu0 0.0
    %405 = vmatprep.subr.mxu0 0.0
    %406 = vmatpush1.msra.mxu0 0.0
    %407 = vmatprep.subr.mxu0 0.0
    %408 = vmatpush1.msra.mxu0 0.0
    %409 = vmatprep.subr.mxu0 0.0
    %410 = vmatpush1.msra.mxu0 0.0
    %411 = vmatprep.subr.mxu0 0.0
    %412 = vmatpush1.msra.mxu0 0.0
    %413 = vmatprep.subr.mxu0 0.0
    %414 = vmatpush1.msra.mxu0 0.0
    %415 = vmatprep.subr.mxu0 0.0
    %416 = vmatpush1.msra.mxu0 0.0
    %417 = vmatprep.subr.mxu0 0.0
    %418 = vmatpush1.msra.mxu0 0.0
    %419 = vmatprep.subr.mxu0 0.0
    %420 = vmatpush1.msra.mxu0 0.0
    %421 = vmatprep.subr.mxu0 0.0
    %422 = vmatpush1.msra.mxu0 0.0
    %423 = vmatprep.subr.mxu0 0.0
    %424 = vmatpush1.msra.mxu0 0.0
    %425 = vmatprep.subr.mxu0 0.0
    %426 = vmatpush1.msra.mxu0 0.0
    %427 = vmatprep.subr.mxu0 0.0
    %428 = vmatpush1.msra.mxu0 0.0
    %429 = vmatprep.subr.mxu0 0.0
    %430 = vmatpush1.msra.mxu0 0.0
    %431 = vmatprep.subr.mxu0 0.0
    %432 = vmatpush1.msra.mxu0 0.0
    %433 = vmatprep.mubr.f32.mxu0 0.0
    %434 = vmatmul.mubr.f32.gmra.mrb[0].mxu0 %v367
    %v435 = vpop.f32.mrb[0].mxu0
    %v436 = vadd.f32 0.0, %v435
    %v437 = vpop.f32.mrb[0].mxu0
    %438 = vdwg.mxu0
    %s439 = scalar_lea.vmem %s2, 16
    %v440 = vld [vmem:[%s439] sm:$0xff]
    %v441 = vld [vmem:[%s439 + $0x8] sm:$0xff]
    %s442 = scalar_lea.vmem %s3, 16
    %v443 = vld [vmem:[%s442] sm:$0xff]
    %v444 = vld [vmem:[%s442 + $0x8] sm:$0xff]
    %446 = vset.pattern.permute.xlu0 0
    %447 = vperm.xlu0 %446, %v443
    %v448 = vpop.permute.xlu0 %447
    %451 = vset.pattern.permute.xlu0 0
    %452 = vperm.xlu0 %451, %v444
    %v453 = vpop.permute.xlu0 %452
    %v456 = vsel %vm280, %v440, 0
    %v459 = vsel %vm280, %v441, 0
    %461 = vmatprep.subr.mxu0 0.0
    %462 = vmatpush1.msra.mxu0 %v193
    %463 = vmatprep.subr.mxu0 0.0
    %464 = vmatpush1.msra.mxu0 0.0
    %465 = vmatprep.subr.mxu0 0.0
    %466 = vmatpush1.msra.mxu0 0.0
    %467 = vmatprep.subr.mxu0 0.0
    %468 = vmatpush1.msra.mxu0 0.0
    %469 = vmatprep.subr.mxu0 0.0
    %470 = vmatpush1.msra.mxu0 0.0
    %471 = vmatprep.subr.mxu0 0.0
    %472 = vmatpush1.msra.mxu0 0.0
    %473 = vmatprep.subr.mxu0 0.0
    %474 = vmatpush1.msra.mxu0 0.0
    %475 = vmatprep.subr.mxu0 0.0
    %476 = vmatpush1.msra.mxu0 0.0
    %477 = vmatprep.subr.mxu0 0.0
    %478 = vmatpush1.msra.mxu0 0.0
    %479 = vmatprep.subr.mxu0 0.0
    %480 = vmatpush1.msra.mxu0 0.0
    %481 = vmatprep.subr.mxu0 0.0
    %482 = vmatpush1.msra.mxu0 0.0
    %483 = vmatprep.subr.mxu0 0.0
    %484 = vmatpush1.msra.mxu0 0.0
    %485 = vmatprep.subr.mxu0 0.0
    %486 = vmatpush1.msra.mxu0 0.0
    %487 = vmatprep.subr.mxu0 0.0
    %488 = vmatpush1.msra.mxu0 0.0
    %489 = vmatprep.subr.mxu0 0.0
    %490 = vmatpush1.msra.mxu0 0.0
    %491 = vmatprep.subr.mxu0 0.0
    %492 = vmatpush1.msra.mxu0 0.0
    %493 = vmatprep.subr.mxu0 0.0
    %494 = vmatpush1.msra.mxu0 0.0
    %495 = vmatprep.subr.mxu0 0.0
    %496 = vmatpush1.msra.mxu0 0.0
    %497 = vmatprep.subr.mxu0 0.0
    %498 = vmatpush1.msra.mxu0 0.0
    %499 = vmatprep.subr.mxu0 0.0
    %500 = vmatpush1.msra.mxu0 0.0
    %501 = vmatprep.subr.mxu0 0.0
    %502 = vmatpush1.msra.mxu0 0.0
    %503 = vmatprep.subr.mxu0 0.0
    %504 = vmatpush1.msra.mxu0 0.0
    %505 = vmatprep.subr.mxu0 0.0
    %506 = vmatpush1.msra.mxu0 0.0
    %507 = vmatprep.subr.mxu0 0.0
    %508 = vmatpush1.msra.mxu0 0.0
    %509 = vmatprep.subr.mxu0 0.0
    %510 = vmatpush1.msra.mxu0 0.0
    %511 = vmatprep.subr.mxu0 0.0
    %512 = vmatpush1.msra.mxu0 0.0
    %513 = vmatprep.subr.mxu0 0.0
    %514 = vmatpush1.msra.mxu0 0.0
    %515 = vmatprep.subr.mxu0 0.0
    %516 = vmatpush1.msra.mxu0 0.0
    %517 = vmatprep.subr.mxu0 0.0
    %518 = vmatpush1.msra.mxu0 0.0
    %519 = vmatprep.subr.mxu0 0.0
    %520 = vmatpush1.msra.mxu0 0.0
    %521 = vmatprep.subr.mxu0 0.0
    %522 = vmatpush1.msra.mxu0 0.0
    %523 = vmatprep.subr.mxu0 0.0
    %524 = vmatpush1.msra.mxu0 0.0
    %525 = vmatprep.mubr.f32.mxu0 0.0
    %526 = vmatmul.mubr.f32.gmra.mrb[0].mxu0 %v456
    %v527 = vpop.f32.mrb[0].mxu0
    %v528 = vadd.f32 %v448, %v527
    %v529 = vpop.f32.mrb[0].mxu0
    %530 = vmatprep.mubr.f32.mxu0 0.0
    %531 = vmatmul.mubr.f32.gmra.mrb[0].mxu0 %v459
    %v532 = vpop.f32.mrb[0].mxu0
    %v533 = vadd.f32 %v453, %v532
    %v534 = vpop.f32.mrb[0].mxu0
    %535 = vdwg.mxu0
    %v536 = vmax.f32 %v528, 0.0
    %v537 = vmax.f32 %v533, 0.0
    %s538 = scalar_lea.vmem %s5, 8
    %v539 = vld [vmem:[%s538] sm:$0xff]
    %v541 = vsel %vm365, %v539, 0
    %543 = vmatprep.subr.mxu0 0.0
    %544 = vmatpush1.msra.mxu0 %v536
    %545 = vmatprep.subr.mxu0 0.0
    %546 = vmatpush1.msra.mxu0 %v537
    %547 = vmatprep.subr.mxu0 0.0
    %548 = vmatpush1.msra.mxu0 0.0
    %549 = vmatprep.subr.mxu0 0.0
    %550 = vmatpush1.msra.mxu0 0.0
    %551 = vmatprep.subr.mxu0 0.0
    %552 = vmatpush1.msra.mxu0 0.0
    %553 = vmatprep.subr.mxu0 0.0
    %554 = vmatpush1.msra.mxu0 0.0
    %555 = vmatprep.subr.mxu0 0.0
    %556 = vmatpush1.msra.mxu0 0.0
    %557 = vmatprep.subr.mxu0 0.0
    %558 = vmatpush1.msra.mxu0 0.0
    %559 = vmatprep.subr.mxu0 0.0
    %560 = vmatpush1.msra.mxu0 0.0
    %561 = vmatprep.subr.mxu0 0.0
    %562 = vmatpush1.msra.mxu0 0.0
    %563 = vmatprep.subr.mxu0 0.0
    %564 = vmatpush1.msra.mxu0 0.0
    %565 = vmatprep.subr.mxu0 0.0
    %566 = vmatpush1.msra.mxu0 0.0
    %567 = vmatprep.subr.mxu0 0.0
    %568 = vmatpush1.msra.mxu0 0.0
    %569 = vmatprep.subr.mxu0 0.0
    %570 = vmatpush1.msra.mxu0 0.0
    %571 = vmatprep.subr.mxu0 0.0
    %572 = vmatpush1.msra.mxu0 0.0
    %573 = vmatprep.subr.mxu0 0.0
    %574 = vmatpush1.msra.mxu0 0.0
    %575 = vmatprep.subr.mxu0 0.0
    %576 = vmatpush1.msra.mxu0 0.0
    %577 = vmatprep.subr.mxu0 0.0
    %578 = vmatpush1.msra.mxu0 0.0
    %579 = vmatprep.subr.mxu0 0.0
    %580 = vmatpush1.msra.mxu0 0.0
    %581 = vmatprep.subr.mxu0 0.0
    %582 = vmatpush1.msra.mxu0 0.0
    %583 = vmatprep.subr.mxu0 0.0
    %584 = vmatpush1.msra.mxu0 0.0
    %585 = vmatprep.subr.mxu0 0.0
    %586 = vmatpush1.msra.mxu0 0.0
    %587 = vmatprep.subr.mxu0 0.0
    %588 = vmatpush1.msra.mxu0 0.0
    %589 = vmatprep.subr.mxu0 0.0
    %590 = vmatpush1.msra.mxu0 0.0
    %591 = vmatprep.subr.mxu0 0.0
    %592 = vmatpush1.msra.mxu0 0.0
    %593 = vmatprep.subr.mxu0 0.0
    %594 = vmatpush1.msra.mxu0 0.0
    %595 = vmatprep.subr.mxu0 0.0
    %596 = vmatpush1.msra.mxu0 0.0
    %597 = vmatprep.subr.mxu0 0.0
    %598 = vmatpush1.msra.mxu0 0.0
    %599 = vmatprep.subr.mxu0 0.0
    %600 = vmatpush1.msra.mxu0 0.0
    %601 = vmatprep.subr.mxu0 0.0
    %602 = vmatpush1.msra.mxu0 0.0
    %603 = vmatprep.subr.mxu0 0.0
    %604 = vmatpush1.msra.mxu0 0.0
    %605 = vmatprep.subr.mxu0 0.0
    %606 = vmatpush1.msra.mxu0 0.0
    %607 = vmatprep.mubr.f32.mxu0 0.0
    %608 = vmatmul.mubr.f32.gmra.mrb[0].mxu0 %v541
    %v609 = vpop.f32.mrb[0].mxu0
    %v610 = vadd.f32 0.0, %v609
    %v611 = vpop.f32.mrb[0].mxu0
    %612 = vdwg.mxu0
    %s613 = scalar_lea.vmem %s2, 32
    %v614 = vld [vmem:[%s613] sm:$0xff]
    %v615 = vld [vmem:[%s613 + $0x8] sm:$0xff]
    %s616 = scalar_lea.vmem %s3, 32
    %v617 = vld [vmem:[%s616] sm:$0xff]
    %v618 = vld [vmem:[%s616 + $0x8] sm:$0xff]
    %620 = vset.pattern.permute.xlu0 0
    %621 = vperm.xlu0 %620, %v617
    %v622 = vpop.permute.xlu0 %621
    %625 = vset.pattern.permute.xlu0 0
    %626 = vperm.xlu0 %625, %v618
    %v627 = vpop.permute.xlu0 %626
    %v630 = vsel %vm280, %v614, 0
    %v633 = vsel %vm280, %v615, 0
    %635 = vmatprep.subr.mxu0 0.0
    %636 = vmatpush1.msra.mxu0 %v262
    %637 = vmatprep.subr.mxu0 0.0
    %638 = vmatpush1.msra.mxu0 0.0
    %639 = vmatprep.subr.mxu0 0.0
    %640 = vmatpush1.msra.mxu0 0.0
    %641 = vmatprep.subr.mxu0 0.0
    %642 = vmatpush1.msra.mxu0 0.0
    %643 = vmatprep.subr.mxu0 0.0
    %644 = vmatpush1.msra.mxu0 0.0
    %645 = vmatprep.subr.mxu0 0.0
    %646 = vmatpush1.msra.mxu0 0.0
    %647 = vmatprep.subr.mxu0 0.0
    %648 = vmatpush1.msra.mxu0 0.0
    %649 = vmatprep.subr.mxu0 0.0
    %650 = vmatpush1.msra.mxu0 0.0
    %651 = vmatprep.subr.mxu0 0.0
    %652 = vmatpush1.msra.mxu0 0.0
    %653 = vmatprep.subr.mxu0 0.0
    %654 = vmatpush1.msra.mxu0 0.0
    %655 = vmatprep.subr.mxu0 0.0
    %656 = vmatpush1.msra.mxu0 0.0
    %657 = vmatprep.subr.mxu0 0.0
    %658 = vmatpush1.msra.mxu0 0.0
    %659 = vmatprep.subr.mxu0 0.0
    %660 = vmatpush1.msra.mxu0 0.0
    %661 = vmatprep.subr.mxu0 0.0
    %662 = vmatpush1.msra.mxu0 0.0
    %663 = vmatprep.subr.mxu0 0.0
    %664 = vmatpush1.msra.mxu0 0.0
    %665 = vmatprep.subr.mxu0 0.0
    %666 = vmatpush1.msra.mxu0 0.0
    %667 = vmatprep.subr.mxu0 0.0
    %668 = vmatpush1.msra.mxu0 0.0
    %669 = vmatprep.subr.mxu0 0.0
    %670 = vmatpush1.msra.mxu0 0.0
    %671 = vmatprep.subr.mxu0 0.0
    %672 = vmatpush1.msra.mxu0 0.0
    %673 = vmatprep.subr.mxu0 0.0
    %674 = vmatpush1.msra.mxu0 0.0
    %675 = vmatprep.subr.mxu0 0.0
    %676 = vmatpush1.msra.mxu0 0.0
    %677 = vmatprep.subr.mxu0 0.0
    %678 = vmatpush1.msra.mxu0 0.0
    %679 = vmatprep.subr.mxu0 0.0
    %680 = vmatpush1.msra.mxu0 0.0
    %681 = vmatprep.subr.mxu0 0.0
    %682 = vmatpush1.msra.mxu0 0.0
    %683 = vmatprep.subr.mxu0 0.0
    %684 = vmatpush1.msra.mxu0 0.0
    %685 = vmatprep.subr.mxu0 0.0
    %686 = vmatpush1.msra.mxu0 0.0
    %687 = vmatprep.subr.mxu0 0.0
    %688 = vmatpush1.msra.mxu0 0.0
    %689 = vmatprep.subr.mxu0 0.0
    %690 = vmatpush1.msra.mxu0 0.0
    %691 = vmatprep.subr.mxu0 0.0
    %692 = vmatpush1.msra.mxu0 0.0
    %693 = vmatprep.subr.mxu0 0.0
    %694 = vmatpush1.msra.mxu0 0.0
    %695 = vmatprep.subr.mxu0 0.0
    %696 = vmatpush1.msra.mxu0 0.0
    %697 = vmatprep.subr.mxu0 0.0
    %698 = vmatpush1.msra.mxu0 0.0
    %699 = vmatprep.mubr.f32.mxu0 0.0
    %700 = vmatmul.mubr.f32.gmra.mrb[0].mxu0 %v630
    %v701 = vpop.f32.mrb[0].mxu0
    %v702 = vadd.f32 %v622, %v701
    %v703 = vpop.f32.mrb[0].mxu0
    %704 = vmatprep.mubr.f32.mxu0 0.0
    %705 = vmatmul.mubr.f32.gmra.mrb[0].mxu0 %v633
    %v706 = vpop.f32.mrb[0].mxu0
    %v707 = vadd.f32 %v627, %v706
    %v708 = vpop.f32.mrb[0].mxu0
    %709 = vdwg.mxu0
    %v710 = vmax.f32 %v702, 0.0
    %v711 = vmax.f32 %v707, 0.0
    %s712 = scalar_lea.vmem %s5, 16
    %v713 = vld [vmem:[%s712] sm:$0xff]
    %v715 = vsel %vm365, %v713, 0
    %717 = vmatprep.subr.mxu0 0.0
    %718 = vmatpush1.msra.mxu0 %v710
    %719 = vmatprep.subr.mxu0 0.0
    %720 = vmatpush1.msra.mxu0 %v711
    %721 = vmatprep.subr.mxu0 0.0
    %722 = vmatpush1.msra.mxu0 0.0
    %723 = vmatprep.subr.mxu0 0.0
    %724 = vmatpush1.msra.mxu0 0.0
    %725 = vmatprep.subr.mxu0 0.0
    %726 = vmatpush1.msra.mxu0 0.0
    %727 = vmatprep.subr.mxu0 0.0
    %728 = vmatpush1.msra.mxu0 0.0
    %729 = vmatprep.subr.mxu0 0.0
    %730 = vmatpush1.msra.mxu0 0.0
    %731 = vmatprep.subr.mxu0 0.0
    %732 = vmatpush1.msra.mxu0 0.0
    %733 = vmatprep.subr.mxu0 0.0
    %734 = vmatpush1.msra.mxu0 0.0
    %735 = vmatprep.subr.mxu0 0.0
    %736 = vmatpush1.msra.mxu0 0.0
    %737 = vmatprep.subr.mxu0 0.0
    %738 = vmatpush1.msra.mxu0 0.0
    %739 = vmatprep.subr.mxu0 0.0
    %740 = vmatpush1.msra.mxu0 0.0
    %741 = vmatprep.subr.mxu0 0.0
    %742 = vmatpush1.msra.mxu0 0.0
    %743 = vmatprep.subr.mxu0 0.0
    %744 = vmatpush1.msra.mxu0 0.0
    %745 = vmatprep.subr.mxu0 0.0
    %746 = vmatpush1.msra.mxu0 0.0
    %747 = vmatprep.subr.mxu0 0.0
    %748 = vmatpush1.msra.mxu0 0.0
    %749 = vmatprep.subr.mxu0 0.0
    %750 = vmatpush1.msra.mxu0 0.0
    %751 = vmatprep.subr.mxu0 0.0
    %752 = vmatpush1.msra.mxu0 0.0
    %753 = vmatprep.subr.mxu0 0.0
    %754 = vmatpush1.msra.mxu0 0.0
    %755 = vmatprep.subr.mxu0 0.0
    %756 = vmatpush1.msra.mxu0 0.0
    %757 = vmatprep.subr.mxu0 0.0
    %758 = vmatpush1.msra.mxu0 0.0
    %759 = vmatprep.subr.mxu0 0.0
    %760 = vmatpush1.msra.mxu0 0.0
    %761 = vmatprep.subr.mxu0 0.0
    %762 = vmatpush1.msra.mxu0 0.0
    %763 = vmatprep.subr.mxu0 0.0
    %764 = vmatpush1.msra.mxu0 0.0
    %765 = vmatprep.subr.mxu0 0.0
    %766 = vmatpush1.msra.mxu0 0.0
    %767 = vmatprep.subr.mxu0 0.0
    %768 = vmatpush1.msra.mxu0 0.0
    %769 = vmatprep.subr.mxu0 0.0
    %770 = vmatpush1.msra.mxu0 0.0
    %771 = vmatprep.subr.mxu0 0.0
    %772 = vmatpush1.msra.mxu0 0.0
    %773 = vmatprep.subr.mxu0 0.0
    %774 = vmatpush1.msra.mxu0 0.0
    %775 = vmatprep.subr.mxu0 0.0
    %776 = vmatpush1.msra.mxu0 0.0
    %777 = vmatprep.subr.mxu0 0.0
    %778 = vmatpush1.msra.mxu0 0.0
    %779 = vmatprep.subr.mxu0 0.0
    %780 = vmatpush1.msra.mxu0 0.0
    %781 = vmatprep.mubr.f32.mxu0 0.0
    %782 = vmatmul.mubr.f32.gmra.mrb[0].mxu0 %v715
    %v783 = vpop.f32.mrb[0].mxu0
    %v784 = vadd.f32 0.0, %v783
    %v785 = vpop.f32.mrb[0].mxu0
    %786 = vdwg.mxu0
    %s787 = scalar_lea.vmem %s2, 48
    %v788 = vld [vmem:[%s787] sm:$0xff]
    %v789 = vld [vmem:[%s787 + $0x8] sm:$0xff]
    %s790 = scalar_lea.vmem %s3, 48
    %v791 = vld [vmem:[%s790] sm:$0xff]
    %v792 = vld [vmem:[%s790 + $0x8] sm:$0xff]
    %794 = vset.pattern.permute.xlu0 0
    %795 = vperm.xlu0 %794, %v791
    %v796 = vpop.permute.xlu0 %795
    %799 = vset.pattern.permute.xlu0 0
    %800 = vperm.xlu0 %799, %v792
    %v801 = vpop.permute.xlu0 %800
    %v804 = vsel %vm280, %v788, 0
    %v807 = vsel %vm280, %v789, 0
    %809 = vmatprep.subr.mxu0 0.0
    %810 = vmatpush1.msra.mxu0 %v264
    %811 = vmatprep.subr.mxu0 0.0
    %812 = vmatpush1.msra.mxu0 0.0
    %813 = vmatprep.subr.mxu0 0.0
    %814 = vmatpush1.msra.mxu0 0.0
    %815 = vmatprep.subr.mxu0 0.0
    %816 = vmatpush1.msra.mxu0 0.0
    %817 = vmatprep.subr.mxu0 0.0
    %818 = vmatpush1.msra.mxu0 0.0
    %819 = vmatprep.subr.mxu0 0.0
    %820 = vmatpush1.msra.mxu0 0.0
    %821 = vmatprep.subr.mxu0 0.0
    %822 = vmatpush1.msra.mxu0 0.0
    %823 = vmatprep.subr.mxu0 0.0
    %824 = vmatpush1.msra.mxu0 0.0
    %825 = vmatprep.subr.mxu0 0.0
    %826 = vmatpush1.msra.mxu0 0.0
    %827 = vmatprep.subr.mxu0 0.0
    %828 = vmatpush1.msra.mxu0 0.0
    %829 = vmatprep.subr.mxu0 0.0
    %830 = vmatpush1.msra.mxu0 0.0
    %831 = vmatprep.subr.mxu0 0.0
    %832 = vmatpush1.msra.mxu0 0.0
    %833 = vmatprep.subr.mxu0 0.0
    %834 = vmatpush1.msra.mxu0 0.0
    %835 = vmatprep.subr.mxu0 0.0
    %836 = vmatpush1.msra.mxu0 0.0
    %837 = vmatprep.subr.mxu0 0.0
    %838 = vmatpush1.msra.mxu0 0.0
    %839 = vmatprep.subr.mxu0 0.0
    %840 = vmatpush1.msra.mxu0 0.0
    %841 = vmatprep.subr.mxu0 0.0
    %842 = vmatpush1.msra.mxu0 0.0
    %843 = vmatprep.subr.mxu0 0.0
    %844 = vmatpush1.msra.mxu0 0.0
    %845 = vmatprep.subr.mxu0 0.0
    %846 = vmatpush1.msra.mxu0 0.0
    %847 = vmatprep.subr.mxu0 0.0
    %848 = vmatpush1.msra.mxu0 0.0
    %849 = vmatprep.subr.mxu0 0.0
    %850 = vmatpush1.msra.mxu0 0.0
    %851 = vmatprep.subr.mxu0 0.0
    %852 = vmatpush1.msra.mxu0 0.0
    %853 = vmatprep.subr.mxu0 0.0
    %854 = vmatpush1.msra.mxu0 0.0
    %855 = vmatprep.subr.mxu0 0.0
    %856 = vmatpush1.msra.mxu0 0.0
    %857 = vmatprep.subr.mxu0 0.0
    %858 = vmatpush1.msra.mxu0 0.0
    %859 = vmatprep.subr.mxu0 0.0
    %860 = vmatpush1.msra.mxu0 0.0
    %861 = vmatprep.subr.mxu0 0.0
    %862 = vmatpush1.msra.mxu0 0.0
    %863 = vmatprep.subr.mxu0 0.0
    %864 = vmatpush1.msra.mxu0 0.0
    %865 = vmatprep.subr.mxu0 0.0
    %866 = vmatpush1.msra.mxu0 0.0
    %867 = vmatprep.subr.mxu0 0.0
    %868 = vmatpush1.msra.mxu0 0.0
    %869 = vmatprep.subr.mxu0 0.0
    %870 = vmatpush1.msra.mxu0 0.0
    %871 = vmatprep.subr.mxu0 0.0
    %872 = vmatpush1.msra.mxu0 0.0
    %873 = vmatprep.mubr.f32.mxu0 0.0
    %874 = vmatmul.mubr.f32.gmra.mrb[0].mxu0 %v804
    %v875 = vpop.f32.mrb[0].mxu0
    %v876 = vadd.f32 %v796, %v875
    %v877 = vpop.f32.mrb[0].mxu0
    %878 = vmatprep.mubr.f32.mxu0 0.0
    %879 = vmatmul.mubr.f32.gmra.mrb[0].mxu0 %v807
    %v880 = vpop.f32.mrb[0].mxu0
    %v881 = vadd.f32 %v801, %v880
    %v882 = vpop.f32.mrb[0].mxu0
    %883 = vdwg.mxu0
    %v884 = vmax.f32 %v876, 0.0
    %v885 = vmax.f32 %v881, 0.0
    %s886 = scalar_lea.vmem %s5, 24
    %v887 = vld [vmem:[%s886] sm:$0xff]
    %v889 = vsel %vm365, %v887, 0
    %891 = vmatprep.subr.mxu0 0.0
    %892 = vmatpush1.msra.mxu0 %v884
    %893 = vmatprep.subr.mxu0 0.0
    %894 = vmatpush1.msra.mxu0 %v885
    %895 = vmatprep.subr.mxu0 0.0
    %896 = vmatpush1.msra.mxu0 0.0
    %897 = vmatprep.subr.mxu0 0.0
    %898 = vmatpush1.msra.mxu0 0.0
    %899 = vmatprep.subr.mxu0 0.0
    %900 = vmatpush1.msra.mxu0 0.0
    %901 = vmatprep.subr.mxu0 0.0
    %902 = vmatpush1.msra.mxu0 0.0
    %903 = vmatprep.subr.mxu0 0.0
    %904 = vmatpush1.msra.mxu0 0.0
    %905 = vmatprep.subr.mxu0 0.0
    %906 = vmatpush1.msra.mxu0 0.0
    %907 = vmatprep.subr.mxu0 0.0
    %908 = vmatpush1.msra.mxu0 0.0
    %909 = vmatprep.subr.mxu0 0.0
    %910 = vmatpush1.msra.mxu0 0.0
    %911 = vmatprep.subr.mxu0 0.0
    %912 = vmatpush1.msra.mxu0 0.0
    %913 = vmatprep.subr.mxu0 0.0
    %914 = vmatpush1.msra.mxu0 0.0
    %915 = vmatprep.subr.mxu0 0.0
    %916 = vmatpush1.msra.mxu0 0.0
    %917 = vmatprep.subr.mxu0 0.0
    %918 = vmatpush1.msra.mxu0 0.0
    %919 = vmatprep.subr.mxu0 0.0
    %920 = vmatpush1.msra.mxu0 0.0
    %921 = vmatprep.subr.mxu0 0.0
    %922 = vmatpush1.msra.mxu0 0.0
    %923 = vmatprep.subr.mxu0 0.0
    %924 = vmatpush1.msra.mxu0 0.0
    %925 = vmatprep.subr.mxu0 0.0
    %926 = vmatpush1.msra.mxu0 0.0
    %927 = vmatprep.subr.mxu0 0.0
    %928 = vmatpush1.msra.mxu0 0.0
    %929 = vmatprep.subr.mxu0 0.0
    %930 = vmatpush1.msra.mxu0 0.0
    %931 = vmatprep.subr.mxu0 0.0
    %932 = vmatpush1.msra.mxu0 0.0
    %933 = vmatprep.subr.mxu0 0.0
    %934 = vmatpush1.msra.mxu0 0.0
    %935 = vmatprep.subr.mxu0 0.0
    %936 = vmatpush1.msra.mxu0 0.0
    %937 = vmatprep.subr.mxu0 0.0
    %938 = vmatpush1.msra.mxu0 0.0
    %939 = vmatprep.subr.mxu0 0.0
    %940 = vmatpush1.msra.mxu0 0.0
    %941 = vmatprep.subr.mxu0 0.0
    %942 = vmatpush1.msra.mxu0 0.0
    %943 = vmatprep.subr.mxu0 0.0
    %944 = vmatpush1.msra.mxu0 0.0
    %945 = vmatprep.subr.mxu0 0.0
    %946 = vmatpush1.msra.mxu0 0.0
    %947 = vmatprep.subr.mxu0 0.0
    %948 = vmatpush1.msra.mxu0 0.0
    %949 = vmatprep.subr.mxu0 0.0
    %950 = vmatpush1.msra.mxu0 0.0
    %951 = vmatprep.subr.mxu0 0.0
    %952 = vmatpush1.msra.mxu0 0.0
    %953 = vmatprep.subr.mxu0 0.0
    %954 = vmatpush1.msra.mxu0 0.0
    %955 = vmatprep.mubr.f32.mxu0 0.0
    %956 = vmatmul.mubr.f32.gmra.mrb[0].mxu0 %v889
    %v957 = vpop.f32.mrb[0].mxu0
    %v958 = vadd.f32 0.0, %v957
    %v959 = vpop.f32.mrb[0].mxu0
    %960 = vdwg.mxu0
    %v961 = vld [vmem:[#allocation5] sm:$0xff]
    %v962 = vld [vmem:[#allocation5 + $0x8] sm:$0xff]
    %v963 = vld [vmem:[#allocation5 + $0x10] sm:$0xff]
    %v964 = vld [vmem:[#allocation5 + $0x18] sm:$0xff]
    %v965 = vld [vmem:[#allocation5 + $0x20] sm:$0xff]
    %v966 = vld [vmem:[#allocation5 + $0x28] sm:$0xff]
    %v967 = vld [vmem:[#allocation5 + $0x30] sm:$0xff]
    %v968 = vld [vmem:[#allocation5 + $0x38] sm:$0xff]
    %v969 = vld [vmem:[#allocation5 + $0x40] sm:$0xff]
    %v970 = vld [vmem:[#allocation5 + $0x48] sm:$0xff]
    %v971 = vld [vmem:[#allocation5 + $0x50] sm:$0xff]
    %v972 = vld [vmem:[#allocation5 + $0x58] sm:$0xff]
    %v973 = vld [vmem:[#allocation5 + $0x60] sm:$0xff]
    %v974 = vld [vmem:[#allocation5 + $0x68] sm:$0xff]
    %v975 = vld [vmem:[#allocation5 + $0x70] sm:$0xff]
    %v976 = vld [vmem:[#allocation5 + $0x78] sm:$0xff]
    %v977 = vld [vmem:[#allocation5 + $0x80] sm:$0xff]
    %v978 = vld [vmem:[#allocation5 + $0x88] sm:$0xff]
    %v979 = vld [vmem:[#allocation5 + $0x90] sm:$0xff]
    %v980 = vld [vmem:[#allocation5 + $0x98] sm:$0xff]
    %v981 = vld [vmem:[#allocation5 + $0xa0] sm:$0xff]
    %v982 = vld [vmem:[#allocation5 + $0xa8] sm:$0xff]
    %v983 = vld [vmem:[#allocation5 + $0xb0] sm:$0xff]
    %v984 = vld [vmem:[#allocation5 + $0xb8] sm:$0xff]
    %v985 = vld [vmem:[#allocation5 + $0xc0] sm:$0xff]
    %v986 = vld [vmem:[#allocation5 + $0xc8] sm:$0xff]
    %v987 = vld [vmem:[#allocation5 + $0xd0] sm:$0xff]
    %v988 = vld [vmem:[#allocation5 + $0xd8] sm:$0xff]
    %v989 = vld [vmem:[#allocation5 + $0xe0] sm:$0xff]
    %v990 = vld [vmem:[#allocation5 + $0xe8] sm:$0xff]
    %v991 = vld [vmem:[#allocation5 + $0xf0] sm:$0xff]
    %v992 = vld [vmem:[#allocation5 + $0xf8] sm:$0xff]
    %v993 = vld [vmem:[#allocation5 + $0x100] sm:$0xff]
    %v994 = vld [vmem:[#allocation5 + $0x108] sm:$0xff]
    %v995 = vld [vmem:[#allocation5 + $0x110] sm:$0xff]
    %v996 = vld [vmem:[#allocation5 + $0x118] sm:$0xff]
    %v997 = vld [vmem:[#allocation5 + $0x120] sm:$0xff]
    %v998 = vld [vmem:[#allocation5 + $0x128] sm:$0xff]
    %v999 = vld [vmem:[#allocation5 + $0x130] sm:$0xff]
    %v1000 = vld [vmem:[#allocation5 + $0x138] sm:$0xff]
    %v1001 = vld [vmem:[#allocation5 + $0x140] sm:$0xff]
    %v1002 = vld [vmem:[#allocation5 + $0x148] sm:$0xff]
    %v1003 = vld [vmem:[#allocation5 + $0x150] sm:$0xff]
    %v1004 = vld [vmem:[#allocation5 + $0x158] sm:$0xff]
    %v1005 = vld [vmem:[#allocation5 + $0x160] sm:$0xff]
    %v1006 = vld [vmem:[#allocation5 + $0x168] sm:$0xff]
    %v1007 = vld [vmem:[#allocation5 + $0x170] sm:$0xff]
    %v1008 = vld [vmem:[#allocation5 + $0x178] sm:$0xff]
    %v1009 = vld [vmem:[#allocation5 + $0x180] sm:$0xff]
    %v1010 = vld [vmem:[#allocation5 + $0x188] sm:$0xff]
    %v1011 = vld [vmem:[#allocation5 + $0x190] sm:$0xff]
    %v1012 = vld [vmem:[#allocation5 + $0x198] sm:$0xff]
    %v1013 = vld [vmem:[#allocation5 + $0x1a0] sm:$0xff]
    %v1014 = vld [vmem:[#allocation5 + $0x1a8] sm:$0xff]
    %v1015 = vld [vmem:[#allocation5 + $0x1b0] sm:$0xff]
    %v1016 = vld [vmem:[#allocation5 + $0x1b8] sm:$0xff]
    %v1017 = vld [vmem:[#allocation5 + $0x1c0] sm:$0xff]
    %v1018 = vld [vmem:[#allocation5 + $0x1c8] sm:$0xff]
    %v1019 = vld [vmem:[#allocation5 + $0x1d0] sm:$0xff]
    %v1020 = vld [vmem:[#allocation5 + $0x1d8] sm:$0xff]
    %v1021 = vld [vmem:[#allocation5 + $0x1e0] sm:$0xff]
    %v1022 = vld [vmem:[#allocation5 + $0x1e8] sm:$0xff]
    %v1023 = vld [vmem:[#allocation5 + $0x1f0] sm:$0xff]
    %v1024 = vld [vmem:[#allocation5 + $0x1f8] sm:$0xff]
    %1025 = vmatprep.subr.mxu0 0.0
    %1026 = vmatpush1.msra.mxu0 %v961
    %1027 = vmatprep.subr.mxu0 0.0
    %1028 = vmatpush1.msra.mxu0 %v962
    %1029 = vmatprep.subr.mxu0 0.0
    %1030 = vmatpush1.msra.mxu0 %v963
    %1031 = vmatprep.subr.mxu0 0.0
    %1032 = vmatpush1.msra.mxu0 %v964
    %1033 = vmatprep.subr.mxu0 0.0
    %1034 = vmatpush1.msra.mxu0 %v965
    %1035 = vmatprep.subr.mxu0 0.0
    %1036 = vmatpush1.msra.mxu0 %v966
    %1037 = vmatprep.subr.mxu0 0.0
    %1038 = vmatpush1.msra.mxu0 %v967
    %1039 = vmatprep.subr.mxu0 0.0
    %1040 = vmatpush1.msra.mxu0 %v968
    %1041 = vmatprep.subr.mxu0 0.0
    %1042 = vmatpush1.msra.mxu0 %v969
    %1043 = vmatprep.subr.mxu0 0.0
    %1044 = vmatpush1.msra.mxu0 %v970
    %1045 = vmatprep.subr.mxu0 0.0
    %1046 = vmatpush1.msra.mxu0 %v971
    %1047 = vmatprep.subr.mxu0 0.0
    %1048 = vmatpush1.msra.mxu0 %v972
    %1049 = vmatprep.subr.mxu0 0.0
    %1050 = vmatpush1.msra.mxu0 %v973
    %1051 = vmatprep.subr.mxu0 0.0
    %1052 = vmatpush1.msra.mxu0 %v974
    %1053 = vmatprep.subr.mxu0 0.0
    %1054 = vmatpush1.msra.mxu0 %v975
    %1055 = vmatprep.subr.mxu0 0.0
    %1056 = vmatpush1.msra.mxu0 %v976
    %1057 = vmatprep.subr.mxu0 0.0
    %1058 = vmatpush1.msra.mxu0 %v977
    %1059 = vmatprep.subr.mxu0 0.0
    %1060 = vmatpush1.msra.mxu0 %v978
    %1061 = vmatprep.subr.mxu0 0.0
    %1062 = vmatpush1.msra.mxu0 %v979
    %1063 = vmatprep.subr.mxu0 0.0
    %1064 = vmatpush1.msra.mxu0 %v980
    %1065 = vmatprep.subr.mxu0 0.0
    %1066 = vmatpush1.msra.mxu0 %v981
    %1067 = vmatprep.subr.mxu0 0.0
    %1068 = vmatpush1.msra.mxu0 %v982
    %1069 = vmatprep.subr.mxu0 0.0
    %1070 = vmatpush1.msra.mxu0 %v983
    %1071 = vmatprep.subr.mxu0 0.0
    %1072 = vmatpush1.msra.mxu0 %v984
    %1073 = vmatprep.subr.mxu0 0.0
    %1074 = vmatpush1.msra.mxu0 %v985
    %1075 = vmatprep.subr.mxu0 0.0
    %1076 = vmatpush1.msra.mxu0 %v986
    %1077 = vmatprep.subr.mxu0 0.0
    %1078 = vmatpush1.msra.mxu0 %v987
    %1079 = vmatprep.subr.mxu0 0.0
    %1080 = vmatpush1.msra.mxu0 %v988
    %1081 = vmatprep.subr.mxu0 0.0
    %1082 = vmatpush1.msra.mxu0 %v989
    %1083 = vmatprep.subr.mxu0 0.0
    %1084 = vmatpush1.msra.mxu0 %v990
    %1085 = vmatprep.subr.mxu0 0.0
    %1086 = vmatpush1.msra.mxu0 %v991
    %1087 = vmatprep.subr.mxu0 0.0
    %1088 = vmatpush1.msra.mxu0 %v992
    %1089 = vmatprep.mubr.f32.mxu0 %v610
    %1090 = vmatmul.mubr.f32.gmra.mrb[0].mxu0 %v436
    %v1091 = vpop.f32.mrb[0].mxu0
    %v1092 = vadd.f32 0.0, %v1091
    %v1093 = vpop.f32.mrb[0].mxu0
    %1094 = vdwg.mxu0
    %1095 = vmatprep.subr.mxu0 0.0
    %1096 = vmatpush1.msra.mxu0 %v993
    %1097 = vmatprep.subr.mxu0 0.0
    %1098 = vmatpush1.msra.mxu0 %v994
    %1099 = vmatprep.subr.mxu0 0.0
    %1100 = vmatpush1.msra.mxu0 %v995
    %1101 = vmatprep.subr.mxu0 0.0
    %1102 = vmatpush1.msra.mxu0 %v996
    %1103 = vmatprep.subr.mxu0 0.0
    %1104 = vmatpush1.msra.mxu0 %v997
    %1105 = vmatprep.subr.mxu0 0.0
    %1106 = vmatpush1.msra.mxu0 %v998
    %1107 = vmatprep.subr.mxu0 0.0
    %1108 = vmatpush1.msra.mxu0 %v999
    %1109 = vmatprep.subr.mxu0 0.0
    %1110 = vmatpush1.msra.mxu0 %v1000
    %1111 = vmatprep.subr.mxu0 0.0
    %1112 = vmatpush1.msra.mxu0 %v1001
    %1113 = vmatprep.subr.mxu0 0.0
    %1114 = vmatpush1.msra.mxu0 %v1002
    %1115 = vmatprep.subr.mxu0 0.0
    %1116 = vmatpush1.msra.mxu0 %v1003
    %1117 = vmatprep.subr.mxu0 0.0
    %1118 = vmatpush1.msra.mxu0 %v1004
    %1119 = vmatprep.subr.mxu0 0.0
    %1120 = vmatpush1.msra.mxu0 %v1005
    %1121 = vmatprep.subr.mxu0 0.0
    %1122 = vmatpush1.msra.mxu0 %v1006
    %1123 = vmatprep.subr.mxu0 0.0
    %1124 = vmatpush1.msra.mxu0 %v1007
    %1125 = vmatprep.subr.mxu0 0.0
    %1126 = vmatpush1.msra.mxu0 %v1008
    %1127 = vmatprep.subr.mxu0 0.0
    %1128 = vmatpush1.msra.mxu0 %v1009
    %1129 = vmatprep.subr.mxu0 0.0
    %1130 = vmatpush1.msra.mxu0 %v1010
    %1131 = vmatprep.subr.mxu0 0.0
    %1132 = vmatpush1.msra.mxu0 %v1011
    %1133 = vmatprep.subr.mxu0 0.0
    %1134 = vmatpush1.msra.mxu0 %v1012
    %1135 = vmatprep.subr.mxu0 0.0
    %1136 = vmatpush1.msra.mxu0 %v1013
    %1137 = vmatprep.subr.mxu0 0.0
    %1138 = vmatpush1.msra.mxu0 %v1014
    %1139 = vmatprep.subr.mxu0 0.0
    %1140 = vmatpush1.msra.mxu0 %v1015
    %1141 = vmatprep.subr.mxu0 0.0
    %1142 = vmatpush1.msra.mxu0 %v1016
    %1143 = vmatprep.subr.mxu0 0.0
    %1144 = vmatpush1.msra.mxu0 %v1017
    %1145 = vmatprep.subr.mxu0 0.0
    %1146 = vmatpush1.msra.mxu0 %v1018
    %1147 = vmatprep.subr.mxu0 0.0
    %1148 = vmatpush1.msra.mxu0 %v1019
    %1149 = vmatprep.subr.mxu0 0.0
    %1150 = vmatpush1.msra.mxu0 %v1020
    %1151 = vmatprep.subr.mxu0 0.0
    %1152 = vmatpush1.msra.mxu0 %v1021
    %1153 = vmatprep.subr.mxu0 0.0
    %1154 = vmatpush1.msra.mxu0 %v1022
    %1155 = vmatprep.subr.mxu0 0.0
    %1156 = vmatpush1.msra.mxu0 %v1023
    %1157 = vmatprep.subr.mxu0 0.0
    %1158 = vmatpush1.msra.mxu0 %v1024
    %1159 = vmatprep.mubr.f32.mxu0 %v958
    %1160 = vmatmul.mubr.f32.gmra.mrb[0].mxu0 %v784
    %v1161 = vpop.f32.mrb[0].mxu0
    %v1162 = vadd.f32 %v1092, %v1161
    %v1163 = vpop.f32.mrb[0].mxu0
    %1164 = vdwg.mxu0
    %v1166 = vsel %vm280, %v59, 0
    %1168 = vmatprep.subr.mxu0 0.0
    %1169 = vmatpush1.msra.mxu0 %v58
    %1170 = vmatprep.subr.mxu0 0.0
    %1171 = vmatpush1.msra.mxu0 0.0
    %1172 = vmatprep.subr.mxu0 0.0
    %1173 = vmatpush1.msra.mxu0 0.0
    %1174 = vmatprep.subr.mxu0 0.0
    %1175 = vmatpush1.msra.mxu0 0.0
    %1176 = vmatprep.subr.mxu0 0.0
    %1177 = vmatpush1.msra.mxu0 0.0
    %1178 = vmatprep.subr.mxu0 0.0
    %1179 = vmatpush1.msra.mxu0 0.0
    %1180 = vmatprep.subr.mxu0 0.0
    %1181 = vmatpush1.msra.mxu0 0.0
    %1182 = vmatprep.subr.mxu0 0.0
    %1183 = vmatpush1.msra.mxu0 0.0
    %1184 = vmatprep.subr.mxu0 0.0
    %1185 = vmatpush1.msra.mxu0 0.0
    %1186 = vmatprep.subr.mxu0 0.0
    %1187 = vmatpush1.msra.mxu0 0.0
    %1188 = vmatprep.subr.mxu0 0.0
    %1189 = vmatpush1.msra.mxu0 0.0
    %1190 = vmatprep.subr.mxu0 0.0
    %1191 = vmatpush1.msra.mxu0 0.0
    %1192 = vmatprep.subr.mxu0 0.0
    %1193 = vmatpush1.msra.mxu0 0.0
    %1194 = vmatprep.subr.mxu0 0.0
    %1195 = vmatpush1.msra.mxu0 0.0
    %1196 = vmatprep.subr.mxu0 0.0
    %1197 = vmatpush1.msra.mxu0 0.0
    %1198 = vmatprep.subr.mxu0 0.0
    %1199 = vmatpush1.msra.mxu0 0.0
    %1200 = vmatprep.subr.mxu0 0.0
    %1201 = vmatpush1.msra.mxu0 0.0
    %1202 = vmatprep.subr.mxu0 0.0
    %1203 = vmatpush1.msra.mxu0 0.0
    %1204 = vmatprep.subr.mxu0 0.0
    %1205 = vmatpush1.msra.mxu0 0.0
    %1206 = vmatprep.subr.mxu0 0.0
    %1207 = vmatpush1.msra.mxu0 0.0
    %1208 = vmatprep.subr.mxu0 0.0
    %1209 = vmatpush1.msra.mxu0 0.0
    %1210 = vmatprep.subr.mxu0 0.0
    %1211 = vmatpush1.msra.mxu0 0.0
    %1212 = vmatprep.subr.mxu0 0.0
    %1213 = vmatpush1.msra.mxu0 0.0
    %1214 = vmatprep.subr.mxu0 0.0
    %1215 = vmatpush1.msra.mxu0 0.0
    %1216 = vmatprep.subr.mxu0 0.0
    %1217 = vmatpush1.msra.mxu0 0.0
    %1218 = vmatprep.subr.mxu0 0.0
    %1219 = vmatpush1.msra.mxu0 0.0
    %1220 = vmatprep.subr.mxu0 0.0
    %1221 = vmatpush1.msra.mxu0 0.0
    %1222 = vmatprep.subr.mxu0 0.0
    %1223 = vmatpush1.msra.mxu0 0.0
    %1224 = vmatprep.subr.mxu0 0.0
    %1225 = vmatpush1.msra.mxu0 0.0
    %1226 = vmatprep.subr.mxu0 0.0
    %1227 = vmatpush1.msra.mxu0 0.0
    %1228 = vmatprep.subr.mxu0 0.0
    %1229 = vmatpush1.msra.mxu0 0.0
    %1230 = vmatprep.subr.mxu0 0.0
    %1231 = vmatpush1.msra.mxu0 0.0
    %1232 = vmatprep.mubr.f32.mxu0 0.0
    %1233 = vmatmul.mubr.f32.gmra.mrb[0].mxu0 %v1166
    %v1234 = vpop.f32.mrb[0].mxu0
    %v1235 = vadd.f32 %v1162, %v1234
    %v1236 = vpop.f32.mrb[0].mxu0
    %1237 = vdwg.mxu0
    %v1238 = vld [vmem:[%s7] sm:$0xff]
    %1240 = vset.pattern.permute.xlu0 0
    %1241 = vperm.xlu0 %1240, %v1238
    %v1242 = vpop.permute.xlu0 %1241
    %v1244 = vadd.f32 %v1235, %v1242
    %v1245 = vmax.f32 %v1244, 0.0
    %1246 = vst [vmem:[#allocation7] sm:$0xff] %v1245
    // Predicated region
    $region42: #{tpu_custom_call.1} parent=1 // pred_check
      _
    $region43: #{tpu_custom_call.1} parent=1 // pred_check_branch
      %1248 = sbr.rel (0) target = $region45
    $region44: #{tpu_custom_call.1} parent=1 // pred_region
      %s1250 = ssub.s32 128, 128
      %1251 = vsyncadd [#allocation4], %s1250
      %s1253 = sshll.u32 [#allocation7], 4
      %s1254 = int_to_ptr.vmem [resolvable:$true] %s1253
      %1256 = dma.vmem_to_hbm [thread:$0]  %s1254, 128, %s8, [#allocation4]
    $region45: #{tpu_custom_call.1} parent=1 // pred_fallthru
      _
    // Predicated region
    $region46: #{tpu_custom_call.1} parent=1 // pred_check
      _
    $region47: #{tpu_custom_call.1} parent=1 // pred_check_branch
      %1258 = sbr.rel (0) target = $region49
    $region48: #{tpu_custom_call.1} parent=1 // pred_region
      %1259 = dma.done [#allocation4], 128
    $region49: #{tpu_custom_call.1} parent=1 // pred_fallthru
      _
    %1260 = vsyncpa [#allocation3], 1
    %1261 = vsyncpa [#allocation6], 1
    %1262 = vsyncpa [#allocation4], 1

</llo_original>
